<compile_context>
chip_gen: v6e
topology: v6e:2x2x1
jax: 0.10.0
libtpu: 0.0.40
codegen_flags: <defaults>
</compile_context>

<pallas_src>
import math
import jax
import jax.numpy as jnp
from jax import lax
from jax.experimental import pallas as pl
from jax.experimental.pallas import tpu as pltpu

# ---- small, module-consistent sizes ----
B, N, D = 2, 9, 32            # N = 1 CLS token + 8 patch tokens
BN = B * N
NUM_HEADS = 4
HEAD_DIM = D // NUM_HEADS
MLP_HIDDEN = 4 * D            # mlp_ratio = 4.0
INIT_VALUES = 1e-4
LN_EPS = 1e-5
SCALE = HEAD_DIM ** (-0.5)
INV_SQRT2 = 1.0 / math.sqrt(2.0)


# ----------------------------- Pallas kernel -----------------------------
def rope_block_kernel(x_ref, wA_ref, w2_ref, vecs_ref, cs_ref, bias_ref, o_ref):
    f32 = jnp.float32
    x = x_ref[...]                                      # (BN, D)

    # ---- unpack the vector slab (rows padded to 128 lanes) ----
    ln1w = vecs_ref[0:1, :D]
    ln1b = vecs_ref[1:2, :D]
    ln2w = vecs_ref[2:3, :D]
    ln2b = vecs_ref[3:4, :D]
    bp   = vecs_ref[4:5, :D]
    g1   = vecs_ref[5:6, :D]
    g2   = vecs_ref[6:7, :D]
    b2   = vecs_ref[7:8, :D]
    b1   = vecs_ref[8:9, :]                             # (1, MLP_HIDDEN)

    # ---- LayerNorm 1 ----
    mu = jnp.mean(x, axis=-1, keepdims=True)
    xc = x - mu
    var = jnp.mean(xc * xc, axis=-1, keepdims=True)
    xn = xc * lax.rsqrt(var + LN_EPS) * ln1w + ln1b

    # ---- fused QKV projection + RoPE rotation component: ONE matmul ----
    # columns: [ q | k | v | q@R | k@R ]   (R applied by pre-rotating the weights host-side)
    big = jnp.dot(xn, wA_ref[:, 0:5 * D], preferred_element_type=f32)      # (BN, 5D)

    cos2 = cs_ref[:, 0:2 * D]                            # (BN, 2D)  row-wise cos for [q|k]
    sin2 = cs_ref[:, 2 * D:4 * D]                        # (BN, 2D)  row-wise sin for [q|k]
    qk = big[:, 0:2 * D] * cos2 + big[:, 3 * D:5 * D] * sin2               # RoPE'd [q|k]
    v = big[:, 2 * D:3 * D]                              # (BN, D)

    # ---- multi-head self-attention over the folded (B*N) token axis ----
    # bias is 0 within a batch element and -1e30 across batch elements.
    bias = bias_ref[...]                                 # (BN, BN)
    outs = []
    for h in range(NUM_HEADS):
        lo = h * HEAD_DIM
        qh = qk[:, lo:lo + HEAD_DIM] * SCALE             # (BN, HD)
        kh = qk[:, D + lo:D + lo + HEAD_DIM]             # (BN, HD)
        vh = v[:, lo:lo + HEAD_DIM]                      # (BN, HD)
        s = lax.dot_general(qh, kh, (((1,), (1,)), ((), ())),
                            preferred_element_type=f32) + bias             # (BN, BN)
        s = s - jnp.max(s, axis=-1, keepdims=True)
        p = jnp.exp(s)
        p = p * pl.reciprocal(jnp.sum(p, axis=-1, keepdims=True), approx=True)
        outs.append(jnp.dot(p, vh, preferred_element_type=f32))
    attn = jnp.concatenate(outs, axis=-1)                # (BN, D)

    # ---- output projection + layer-scale residual (gamma_1) ----
    y = jnp.dot(attn, wA_ref[:, 5 * D:6 * D], preferred_element_type=f32) + bp
    x1 = x + g1 * y

    # ---- LayerNorm 2 + MLP (exact GELU) + layer-scale residual (gamma_2) ----
    mu2 = jnp.mean(x1, axis=-1, keepdims=True)
    xc2 = x1 - mu2
    var2 = jnp.mean(xc2 * xc2, axis=-1, keepdims=True)
    xn2 = xc2 * lax.rsqrt(var2 + LN_EPS) * ln2w + ln2b

    h1 = jnp.dot(xn2, wA_ref[:, 6 * D:6 * D + MLP_HIDDEN],
                 preferred_element_type=f32) + b1
    h1 = 0.5 * h1 * (1.0 + lax.erf(h1 * INV_SQRT2))      # torch nn.GELU (exact)
    m = jnp.dot(h1, w2_ref[...], preferred_element_type=f32) + b2

    o_ref[...] = x1 + g2 * m


# ----------------------------- wrapper -----------------------------
def rope_block(x2d, wA, w2, vecs, cs, bias):
    args = (x2d, wA, w2, vecs, cs, bias)

    def full_spec(a):
        nd = a.ndim
        return pl.BlockSpec(a.shape, lambda i, _nd=nd: (0,) * _nd)

    return pl.pallas_call(
        rope_block_kernel,
        out_shape=jax.ShapeDtypeStruct((BN, D), jnp.float32),
        grid_spec=pltpu.PrefetchScalarGridSpec(
            num_scalar_prefetch=0,
            grid=(1,),
            in_specs=[full_spec(a) for a in args],
            out_specs=full_spec(x2d),
        ),
        compiler_params=pltpu.CompilerParams(
            dimension_semantics=("arbitrary",)),
    )(*args)


# ----------------------------- glue: params / freqs / packing -----------------------------
def make_params(key):
    ks = jax.random.split(key, 7)
    w = lambda k, shape: 0.02 * jax.random.normal(k, shape, jnp.float32)
    wqkv = w(ks[0], (3 * D, D))                # torch nn.Linear(dim, 3*dim, bias=False)
    wproj = w(ks[1], (D, D))                   # nn.Linear(dim, dim)
    bproj = w(ks[2], (D,))
    w1 = w(ks[3], (MLP_HIDDEN, D))             # Mlp.fc1
    b1 = w(ks[4], (MLP_HIDDEN,))
    w2 = w(ks[5], (D, MLP_HIDDEN))             # Mlp.fc2
    b2 = w(ks[6], (D,))
    ln1w = jnp.ones((D,), jnp.float32); ln1b = jnp.zeros((D,), jnp.float32)
    ln2w = jnp.ones((D,), jnp.float32); ln2b = jnp.zeros((D,), jnp.float32)
    g1 = INIT_VALUES * jnp.ones((D,), jnp.float32)
    g2 = INIT_VALUES * jnp.ones((D,), jnp.float32)
    return (ln1w, ln1b, wqkv, wproj, bproj, g1, ln2w, ln2b, w1, b1, w2, b2, g2)


def make_freqs():
    # Pre-expanded real interleaved cos/sin of shape (N, D); row 0 = identity (CLS untouched).
    t = jnp.arange(N - 1, dtype=jnp.float32)
    half = HEAD_DIM // 2
    inv = 1.0 / (100.0 ** (jnp.arange(half, dtype=jnp.float32) / half))
    ang = t[:, None] * inv[None, :]                       # (N-1, half)
    cos = jnp.repeat(jnp.cos(ang), 2, axis=-1)            # (N-1, HEAD_DIM), interleaved
    sin = jnp.repeat(jnp.sin(ang), 2, axis=-1)
    cos = jnp.tile(cos, (1, NUM_HEADS))                   # (N-1, D), same for every head
    sin = jnp.tile(sin, (1, NUM_HEADS))
    cos = jnp.concatenate([jnp.ones((1, D), jnp.float32), cos], axis=0)   # (N, D)
    sin = jnp.concatenate([jnp.zeros((1, D), jnp.float32), sin], axis=0)
    return cos, sin


def make_rot():
    # R such that (q @ R)[2i] = -q[2i+1], (q @ R)[2i+1] = q[2i]
    idx = jnp.arange(D)
    even, odd = idx[::2], idx[1::2]
    R = jnp.zeros((D, D), jnp.float32)
    R = R.at[odd, even].set(-1.0)
    R = R.at[even, odd].set(1.0)
    return R


def pack_kernel_inputs(torch_params, cos_full, sin_full, R):
    (ln1w, ln1b, wqkv, wproj, bproj, g1, ln2w, ln2b, w1, b1, w2, b2, g2) = torch_params
    hp = jax.lax.Precision.HIGHEST
    Wq, Wk, Wv = wqkv[:D].T, wqkv[D:2 * D].T, wqkv[2 * D:].T          # each (D, D)
    WqR = jnp.dot(Wq, R, precision=hp)                                # pre-rotated (exact: R is a signed permutation)
    WkR = jnp.dot(Wk, R, precision=hp)

    # slab_A: [ Wq | Wk | Wv | Wq@R | Wk@R | Wproj^T | W1^T ]  -> (D, 320)
    slab_A = jnp.concatenate([Wq, Wk, Wv, WqR, WkR, wproj.T, w1.T], axis=1)
    slab_W2 = w2.T                                                    # (MLP_HIDDEN, D)

    def padrow(v):
        return jnp.pad(v, (0, MLP_HIDDEN - v.shape[0]))[None, :]
    vecs = jnp.concatenate(
        [padrow(v) for v in (ln1w, ln1b, ln2w, ln2b, bproj, g1, g2, b2, b1)],
        axis=0)                                                       # (9, 128)

    # cos/sin for the [q|k] columns, expanded to the folded (B*N) row axis -> (BN, 128)
    cos2 = jnp.tile(jnp.concatenate([cos_full, cos_full], axis=1), (B, 1))
    sin2 = jnp.tile(jnp.concatenate([sin_full, sin_full], axis=1), (B, 1))
    cs = jnp.concatenate([cos2, sin2], axis=1)                        # (BN, 4D) = (18, 128)

    # block-diagonal batch bias: 0 within a batch element, -1e30 across
    rb = jnp.arange(BN) // N
    bias = jnp.where(rb[:, None] == rb[None, :], 0.0, -1e30).astype(jnp.float32)
    return slab_A, slab_W2, vecs, cs, bias


# ----------------------------- pure-JAX reference -----------------------------
def reference(x, cos_full, sin_full, rot, torch_params):
    (ln1w, ln1b, wqkv, wproj, bproj, g1, ln2w, ln2b, w1, b1, w2, b2, g2) = torch_params

    def ln(z, w_, b_):
        mu = z.mean(-1, keepdims=True)
        var = ((z - mu) ** 2).mean(-1, keepdims=True)
        return (z - mu) / jnp.sqrt(var + LN_EPS) * w_ + b_

    xn = ln(x, ln1w, ln1b)
    qkv = xn @ wqkv.T                                     # (B, N, 3D)
    q, k, v = jnp.split(qkv, 3, axis=-1)
    rope = lambda z: z * cos_full + (z @ rot) * sin_full
    q, k = rope(q), rope(k)

    def split_heads(z):
        return z.reshape(B, N, NUM_HEADS, HEAD_DIM).transpose(0, 2, 1, 3)

    qh, kh, vh = split_heads(q) * SCALE, split_heads(k), split_heads(v)
    s = jnp.einsum('bhqd,bhkd->bhqk', qh, kh)
    p = jax.nn.softmax(s, axis=-1)
    o = jnp.einsum('bhqk,bhkd->bhqd', p, vh).transpose(0, 2, 1, 3).reshape(B, N, D)
    x1 = x + g1 * (o @ wproj.T + bproj)

    xn2 = ln(x1, ln2w, ln2b)
    h1 = xn2 @ w1.T + b1
    h1 = 0.5 * h1 * (1.0 + lax.erf(h1 / math.sqrt(2.0)))
    return x1 + g2 * (h1 @ w2.T + b2)


# ----------------------------- main -----------------------------
if __name__ == "__main__":
    key = jax.random.PRNGKey(0)
    kx, kp = jax.random.split(key)
    x = jax.random.normal(kx, (B, N, D), jnp.float32)

    torch_params = make_params(kp)
    cos_full, sin_full = make_freqs()
    rot = make_rot()
    slab_A, slab_W2, vecs, cs, bias = pack_kernel_inputs(torch_params, cos_full, sin_full, rot)

    out2d = rope_block(x.reshape(BN, D), slab_A, slab_W2, vecs, cs, bias)
    out2d = jax.block_until_ready(out2d)
    out = out2d.reshape(B, N, D)

    with jax.default_matmul_precision("float32"):
        ref = jax.block_until_ready(reference(x, cos_full, sin_full, rot, torch_params))

    assert out.shape == (B, N, D)
    assert bool(jnp.all(jnp.isfinite(out)))
    assert bool(jnp.allclose(out, ref, atol=1e-3, rtol=1e-3)), \
        f"max abs diff {float(jnp.max(jnp.abs(out - ref)))}"

    print("KERNEL_OK")
</pallas_src>

<mosaic_0001>
module attributes {stable_mosaic.version = 11 : i64} {
  func.func @rope_block_kernel(%arg0: i32, %arg1: memref<18x32xf32, #tpu.memory_space<vmem>>, %arg2: memref<32x320xf32, #tpu.memory_space<vmem>>, %arg3: memref<128x32xf32, #tpu.memory_space<vmem>>, %arg4: memref<9x128xf32, #tpu.memory_space<vmem>>, %arg5: memref<18x128xf32, #tpu.memory_space<vmem>>, %arg6: memref<18x18xf32, #tpu.memory_space<vmem>>, %arg7: memref<18x32xf32, #tpu.memory_space<vmem>>) attributes {dimension_semantics = [#tpu.dimension_semantics<arbitrary>], iteration_bounds = array<i64: 1>, scalar_prefetch = 0 : i64, scratch_operands = 0 : i64, tpu.core_type = #tpu.core_type<tc>, window_params = [{pipeline_mode = #tpu.pipeline_mode<synchronous>, transform_indices = @transform_0, window_bounds = array<i64: 18, 32>}, {pipeline_mode = #tpu.pipeline_mode<synchronous>, transform_indices = @transform_1, window_bounds = array<i64: 32, 320>}, {pipeline_mode = #tpu.pipeline_mode<synchronous>, transform_indices = @transform_2, window_bounds = array<i64: 128, 32>}, {pipeline_mode = #tpu.pipeline_mode<synchronous>, transform_indices = @transform_3, window_bounds = array<i64: 9, 128>}, {pipeline_mode = #tpu.pipeline_mode<synchronous>, transform_indices = @transform_4, window_bounds = array<i64: 18, 128>}, {pipeline_mode = #tpu.pipeline_mode<synchronous>, transform_indices = @transform_5, window_bounds = array<i64: 18, 18>}, {pipeline_mode = #tpu.pipeline_mode<synchronous>, transform_indices = @transform_6, window_bounds = array<i64: 18, 32>}]} {
    %c0 = arith.constant 0 : index
    %c0_0 = arith.constant 0 : index
    %0 = vector.load %arg1[%c0, %c0_0] : memref<18x32xf32, #tpu.memory_space<vmem>>, vector<18x32xf32>
    %c0_1 = arith.constant 0 : index
    %c0_2 = arith.constant 0 : index
    %1 = vector.load %arg4[%c0_1, %c0_2] : memref<9x128xf32, #tpu.memory_space<vmem>>, vector<1x32xf32>
    %c1 = arith.constant 1 : index
    %c0_3 = arith.constant 0 : index
    %2 = vector.load %arg4[%c1, %c0_3] : memref<9x128xf32, #tpu.memory_space<vmem>>, vector<1x32xf32>
    %c2 = arith.constant 2 : index
    %c0_4 = arith.constant 0 : index
    %3 = vector.load %arg4[%c2, %c0_4] : memref<9x128xf32, #tpu.memory_space<vmem>>, vector<1x32xf32>
    %c3 = arith.constant 3 : index
    %c0_5 = arith.constant 0 : index
    %4 = vector.load %arg4[%c3, %c0_5] : memref<9x128xf32, #tpu.memory_space<vmem>>, vector<1x32xf32>
    %c4 = arith.constant 4 : index
    %c0_6 = arith.constant 0 : index
    %5 = vector.load %arg4[%c4, %c0_6] : memref<9x128xf32, #tpu.memory_space<vmem>>, vector<1x32xf32>
    %c5 = arith.constant 5 : index
    %c0_7 = arith.constant 0 : index
    %6 = vector.load %arg4[%c5, %c0_7] : memref<9x128xf32, #tpu.memory_space<vmem>>, vector<1x32xf32>
    %c6 = arith.constant 6 : index
    %c0_8 = arith.constant 0 : index
    %7 = vector.load %arg4[%c6, %c0_8] : memref<9x128xf32, #tpu.memory_space<vmem>>, vector<1x32xf32>
    %c7 = arith.constant 7 : index
    %c0_9 = arith.constant 0 : index
    %8 = vector.load %arg4[%c7, %c0_9] : memref<9x128xf32, #tpu.memory_space<vmem>>, vector<1x32xf32>
    %c8 = arith.constant 8 : index
    %c0_10 = arith.constant 0 : index
    %9 = vector.load %arg4[%c8, %c0_10] : memref<9x128xf32, #tpu.memory_space<vmem>>, vector<1x128xf32>
    %cst = arith.constant dense<0.000000e+00> : vector<18xf32>
    %10 = vector.multi_reduction <add>, %0, %cst [1] : vector<18x32xf32> to vector<18xf32>
    %11 = vector.shape_cast %10 : vector<18xf32> to vector<18x1xf32>
    %cst_11 = arith.constant 3.200000e+01 : f32
    %12 = vector.broadcast %cst_11 : f32 to vector<18x1xf32>
    %13 = arith.divf %11, %12 : vector<18x1xf32>
    %14 = vector.broadcast %13 : vector<18x1xf32> to vector<18x32xf32>
    %15 = arith.subf %0, %14 : vector<18x32xf32>
    %16 = arith.mulf %15, %15 : vector<18x32xf32>
    %cst_12 = arith.constant dense<0.000000e+00> : vector<18xf32>
    %17 = vector.multi_reduction <add>, %16, %cst_12 [1] : vector<18x32xf32> to vector<18xf32>
    %18 = vector.shape_cast %17 : vector<18xf32> to vector<18x1xf32>
    %cst_13 = arith.constant 3.200000e+01 : f32
    %19 = vector.broadcast %cst_13 : f32 to vector<18x1xf32>
    %20 = arith.divf %18, %19 : vector<18x1xf32>
    %cst_14 = arith.constant 9.99999974E-6 : f32
    %21 = vector.broadcast %cst_14 : f32 to vector<18x1xf32>
    %22 = arith.addf %20, %21 : vector<18x1xf32>
    %23 = math.rsqrt %22 : vector<18x1xf32>
    %24 = vector.broadcast %23 : vector<18x1xf32> to vector<18x32xf32>
    %25 = arith.mulf %15, %24 : vector<18x32xf32>
    %26 = vector.broadcast %1 : vector<1x32xf32> to vector<18x32xf32>
    %27 = arith.mulf %25, %26 : vector<18x32xf32>
    %28 = vector.broadcast %2 : vector<1x32xf32> to vector<18x32xf32>
    %29 = arith.addf %27, %28 : vector<18x32xf32>
    %c0_15 = arith.constant 0 : index
    %c0_16 = arith.constant 0 : index
    %30 = vector.load %arg2[%c0_15, %c0_16] : memref<32x320xf32, #tpu.memory_space<vmem>>, vector<32x160xf32>
    %cst_17 = arith.constant dense<0.000000e+00> : vector<18x160xf32>
    %31 = tpu.matmul %29, %30, %cst_17 {dimension_numbers = #tpu.dot_dimension_numbers<[1], [0], [0], [1], [0, 0, 1, 1], [], []>} : vector<18x32xf32>, vector<32x160xf32>, vector<18x160xf32> -> vector<18x160xf32>
    %c0_18 = arith.constant 0 : index
    %c0_19 = arith.constant 0 : index
    %32 = vector.load %arg5[%c0_18, %c0_19] : memref<18x128xf32, #tpu.memory_space<vmem>>, vector<18x64xf32>
    %c0_20 = arith.constant 0 : index
    %c64 = arith.constant 64 : index
    %33 = vector.load %arg5[%c0_20, %c64] : memref<18x128xf32, #tpu.memory_space<vmem>>, vector<18x64xf32>
    %34 = vector.extract_strided_slice %31 {offsets = [0, 0], sizes = [18, 64], strides = [1, 1]} : vector<18x160xf32> to vector<18x64xf32>
    %35 = arith.mulf %34, %32 : vector<18x64xf32>
    %36 = vector.extract_strided_slice %31 {offsets = [0, 96], sizes = [18, 64], strides = [1, 1]} : vector<18x160xf32> to vector<18x64xf32>
    %37 = arith.mulf %36, %33 : vector<18x64xf32>
    %38 = arith.addf %35, %37 : vector<18x64xf32>
    %39 = vector.extract_strided_slice %31 {offsets = [0, 64], sizes = [18, 32], strides = [1, 1]} : vector<18x160xf32> to vector<18x32xf32>
    %c0_21 = arith.constant 0 : index
    %c0_22 = arith.constant 0 : index
    %40 = vector.load %arg6[%c0_21, %c0_22] : memref<18x18xf32, #tpu.memory_space<vmem>>, vector<18x18xf32>
    %41 = vector.extract_strided_slice %38 {offsets = [0, 0], sizes = [18, 8], strides = [1, 1]} : vector<18x64xf32> to vector<18x8xf32>
    %cst_23 = arith.constant 0.353553385 : f32
    %42 = vector.broadcast %cst_23 : f32 to vector<18x8xf32>
    %43 = arith.mulf %41, %42 : vector<18x8xf32>
    %44 = vector.extract_strided_slice %38 {offsets = [0, 32], sizes = [18, 8], strides = [1, 1]} : vector<18x64xf32> to vector<18x8xf32>
    %45 = vector.extract_strided_slice %39 {offsets = [0, 0], sizes = [18, 8], strides = [1, 1]} : vector<18x32xf32> to vector<18x8xf32>
    %cst_24 = arith.constant dense<0.000000e+00> : vector<18x18xf32>
    %46 = tpu.matmul %43, %44, %cst_24 {dimension_numbers = #tpu.dot_dimension_numbers<[1], [1], [0], [0], [0, 0, 1, 0], [], []>} : vector<18x8xf32>, vector<18x8xf32>, vector<18x18xf32> -> vector<18x18xf32>
    %47 = arith.addf %46, %40 : vector<18x18xf32>
    %cst_25 = arith.constant dense<0xFF800000> : vector<18xf32>
    %48 = vector.multi_reduction <maximumf>, %47, %cst_25 [1] : vector<18x18xf32> to vector<18xf32>
    %49 = vector.shape_cast %48 : vector<18xf32> to vector<18x1xf32>
    %50 = vector.broadcast %49 : vector<18x1xf32> to vector<18x18xf32>
    %51 = arith.subf %47, %50 : vector<18x18xf32>
    %52 = math.exp %51 : vector<18x18xf32>
    %cst_26 = arith.constant dense<0.000000e+00> : vector<18xf32>
    %53 = vector.multi_reduction <add>, %52, %cst_26 [1] : vector<18x18xf32> to vector<18xf32>
    %54 = vector.shape_cast %53 : vector<18xf32> to vector<18x1xf32>
    %55 = tpu.reciprocal %54 {approx = true} : vector<18x1xf32> -> vector<18x1xf32>
    %56 = vector.broadcast %55 : vector<18x1xf32> to vector<18x18xf32>
    %57 = arith.mulf %52, %56 : vector<18x18xf32>
    %cst_27 = arith.constant dense<0.000000e+00> : vector<18x8xf32>
    %58 = tpu.matmul %57, %45, %cst_27 {dimension_numbers = #tpu.dot_dimension_numbers<[1], [0], [0], [1], [0, 0, 1, 1], [], []>} : vector<18x18xf32>, vector<18x8xf32>, vector<18x8xf32> -> vector<18x8xf32>
    %59 = vector.extract_strided_slice %38 {offsets = [0, 8], sizes = [18, 8], strides = [1, 1]} : vector<18x64xf32> to vector<18x8xf32>
    %cst_28 = arith.constant 0.353553385 : f32
    %60 = vector.broadcast %cst_28 : f32 to vector<18x8xf32>
    %61 = arith.mulf %59, %60 : vector<18x8xf32>
    %62 = vector.extract_strided_slice %38 {offsets = [0, 40], sizes = [18, 8], strides = [1, 1]} : vector<18x64xf32> to vector<18x8xf32>
    %63 = vector.extract_strided_slice %39 {offsets = [0, 8], sizes = [18, 8], strides = [1, 1]} : vector<18x32xf32> to vector<18x8xf32>
    %cst_29 = arith.constant dense<0.000000e+00> : vector<18x18xf32>
    %64 = tpu.matmul %61, %62, %cst_29 {dimension_numbers = #tpu.dot_dimension_numbers<[1], [1], [0], [0], [0, 0, 1, 0], [], []>} : vector<18x8xf32>, vector<18x8xf32>, vector<18x18xf32> -> vector<18x18xf32>
    %65 = arith.addf %64, %40 : vector<18x18xf32>
    %cst_30 = arith.constant dense<0xFF800000> : vector<18xf32>
    %66 = vector.multi_reduction <maximumf>, %65, %cst_30 [1] : vector<18x18xf32> to vector<18xf32>
    %67 = vector.shape_cast %66 : vector<18xf32> to vector<18x1xf32>
    %68 = vector.broadcast %67 : vector<18x1xf32> to vector<18x18xf32>
    %69 = arith.subf %65, %68 : vector<18x18xf32>
    %70 = math.exp %69 : vector<18x18xf32>
    %cst_31 = arith.constant dense<0.000000e+00> : vector<18xf32>
    %71 = vector.multi_reduction <add>, %70, %cst_31 [1] : vector<18x18xf32> to vector<18xf32>
    %72 = vector.shape_cast %71 : vector<18xf32> to vector<18x1xf32>
    %73 = tpu.reciprocal %72 {approx = true} : vector<18x1xf32> -> vector<18x1xf32>
    %74 = vector.broadcast %73 : vector<18x1xf32> to vector<18x18xf32>
    %75 = arith.mulf %70, %74 : vector<18x18xf32>
    %cst_32 = arith.constant dense<0.000000e+00> : vector<18x8xf32>
    %76 = tpu.matmul %75, %63, %cst_32 {dimension_numbers = #tpu.dot_dimension_numbers<[1], [0], [0], [1], [0, 0, 1, 1], [], []>} : vector<18x18xf32>, vector<18x8xf32>, vector<18x8xf32> -> vector<18x8xf32>
    %77 = vector.extract_strided_slice %38 {offsets = [0, 16], sizes = [18, 8], strides = [1, 1]} : vector<18x64xf32> to vector<18x8xf32>
    %cst_33 = arith.constant 0.353553385 : f32
    %78 = vector.broadcast %cst_33 : f32 to vector<18x8xf32>
    %79 = arith.mulf %77, %78 : vector<18x8xf32>
    %80 = vector.extract_strided_slice %38 {offsets = [0, 48], sizes = [18, 8], strides = [1, 1]} : vector<18x64xf32> to vector<18x8xf32>
    %81 = vector.extract_strided_slice %39 {offsets = [0, 16], sizes = [18, 8], strides = [1, 1]} : vector<18x32xf32> to vector<18x8xf32>
    %cst_34 = arith.constant dense<0.000000e+00> : vector<18x18xf32>
    %82 = tpu.matmul %79, %80, %cst_34 {dimension_numbers = #tpu.dot_dimension_numbers<[1], [1], [0], [0], [0, 0, 1, 0], [], []>} : vector<18x8xf32>, vector<18x8xf32>, vector<18x18xf32> -> vector<18x18xf32>
    %83 = arith.addf %82, %40 : vector<18x18xf32>
    %cst_35 = arith.constant dense<0xFF800000> : vector<18xf32>
    %84 = vector.multi_reduction <maximumf>, %83, %cst_35 [1] : vector<18x18xf32> to vector<18xf32>
    %85 = vector.shape_cast %84 : vector<18xf32> to vector<18x1xf32>
    %86 = vector.broadcast %85 : vector<18x1xf32> to vector<18x18xf32>
    %87 = arith.subf %83, %86 : vector<18x18xf32>
    %88 = math.exp %87 : vector<18x18xf32>
    %cst_36 = arith.constant dense<0.000000e+00> : vector<18xf32>
    %89 = vector.multi_reduction <add>, %88, %cst_36 [1] : vector<18x18xf32> to vector<18xf32>
    %90 = vector.shape_cast %89 : vector<18xf32> to vector<18x1xf32>
    %91 = tpu.reciprocal %90 {approx = true} : vector<18x1xf32> -> vector<18x1xf32>
    %92 = vector.broadcast %91 : vector<18x1xf32> to vector<18x18xf32>
    %93 = arith.mulf %88, %92 : vector<18x18xf32>
    %cst_37 = arith.constant dense<0.000000e+00> : vector<18x8xf32>
    %94 = tpu.matmul %93, %81, %cst_37 {dimension_numbers = #tpu.dot_dimension_numbers<[1], [0], [0], [1], [0, 0, 1, 1], [], []>} : vector<18x18xf32>, vector<18x8xf32>, vector<18x8xf32> -> vector<18x8xf32>
    %95 = vector.extract_strided_slice %38 {offsets = [0, 24], sizes = [18, 8], strides = [1, 1]} : vector<18x64xf32> to vector<18x8xf32>
    %cst_38 = arith.constant 0.353553385 : f32
    %96 = vector.broadcast %cst_38 : f32 to vector<18x8xf32>
    %97 = arith.mulf %95, %96 : vector<18x8xf32>
    %98 = vector.extract_strided_slice %38 {offsets = [0, 56], sizes = [18, 8], strides = [1, 1]} : vector<18x64xf32> to vector<18x8xf32>
    %99 = vector.extract_strided_slice %39 {offsets = [0, 24], sizes = [18, 8], strides = [1, 1]} : vector<18x32xf32> to vector<18x8xf32>
    %cst_39 = arith.constant dense<0.000000e+00> : vector<18x18xf32>
    %100 = tpu.matmul %97, %98, %cst_39 {dimension_numbers = #tpu.dot_dimension_numbers<[1], [1], [0], [0], [0, 0, 1, 0], [], []>} : vector<18x8xf32>, vector<18x8xf32>, vector<18x18xf32> -> vector<18x18xf32>
    %101 = arith.addf %100, %40 : vector<18x18xf32>
    %cst_40 = arith.constant dense<0xFF800000> : vector<18xf32>
    %102 = vector.multi_reduction <maximumf>, %101, %cst_40 [1] : vector<18x18xf32> to vector<18xf32>
    %103 = vector.shape_cast %102 : vector<18xf32> to vector<18x1xf32>
    %104 = vector.broadcast %103 : vector<18x1xf32> to vector<18x18xf32>
    %105 = arith.subf %101, %104 : vector<18x18xf32>
    %106 = math.exp %105 : vector<18x18xf32>
    %cst_41 = arith.constant dense<0.000000e+00> : vector<18xf32>
    %107 = vector.multi_reduction <add>, %106, %cst_41 [1] : vector<18x18xf32> to vector<18xf32>
    %108 = vector.shape_cast %107 : vector<18xf32> to vector<18x1xf32>
    %109 = tpu.reciprocal %108 {approx = true} : vector<18x1xf32> -> vector<18x1xf32>
    %110 = vector.broadcast %109 : vector<18x1xf32> to vector<18x18xf32>
    %111 = arith.mulf %106, %110 : vector<18x18xf32>
    %cst_42 = arith.constant dense<0.000000e+00> : vector<18x8xf32>
    %112 = tpu.matmul %111, %99, %cst_42 {dimension_numbers = #tpu.dot_dimension_numbers<[1], [0], [0], [1], [0, 0, 1, 1], [], []>} : vector<18x18xf32>, vector<18x8xf32>, vector<18x8xf32> -> vector<18x8xf32>
    %113 = tpu.concatenate %58, %76, %94, %112 in 1 : vector<18x8xf32>, vector<18x8xf32>, vector<18x8xf32>, vector<18x8xf32> -> vector<18x32xf32>
    %c0_43 = arith.constant 0 : index
    %c160 = arith.constant 160 : index
    %114 = vector.load %arg2[%c0_43, %c160] : memref<32x320xf32, #tpu.memory_space<vmem>>, vector<32x32xf32>
    %cst_44 = arith.constant dense<0.000000e+00> : vector<18x32xf32>
    %115 = tpu.matmul %113, %114, %cst_44 {dimension_numbers = #tpu.dot_dimension_numbers<[1], [0], [0], [1], [0, 0, 1, 1], [], []>} : vector<18x32xf32>, vector<32x32xf32>, vector<18x32xf32> -> vector<18x32xf32>
    %116 = vector.broadcast %5 : vector<1x32xf32> to vector<18x32xf32>
    %117 = arith.addf %115, %116 : vector<18x32xf32>
    %118 = vector.broadcast %6 : vector<1x32xf32> to vector<18x32xf32>
    %119 = arith.mulf %118, %117 : vector<18x32xf32>
    %120 = arith.addf %0, %119 : vector<18x32xf32>
    %cst_45 = arith.constant dense<0.000000e+00> : vector<18xf32>
    %121 = vector.multi_reduction <add>, %120, %cst_45 [1] : vector<18x32xf32> to vector<18xf32>
    %122 = vector.shape_cast %121 : vector<18xf32> to vector<18x1xf32>
    %cst_46 = arith.constant 3.200000e+01 : f32
    %123 = vector.broadcast %cst_46 : f32 to vector<18x1xf32>
    %124 = arith.divf %122, %123 : vector<18x1xf32>
    %125 = vector.broadcast %124 : vector<18x1xf32> to vector<18x32xf32>
    %126 = arith.subf %120, %125 : vector<18x32xf32>
    %127 = arith.mulf %126, %126 : vector<18x32xf32>
    %cst_47 = arith.constant dense<0.000000e+00> : vector<18xf32>
    %128 = vector.multi_reduction <add>, %127, %cst_47 [1] : vector<18x32xf32> to vector<18xf32>
    %129 = vector.shape_cast %128 : vector<18xf32> to vector<18x1xf32>
    %cst_48 = arith.constant 3.200000e+01 : f32
    %130 = vector.broadcast %cst_48 : f32 to vector<18x1xf32>
    %131 = arith.divf %129, %130 : vector<18x1xf32>
    %cst_49 = arith.constant 9.99999974E-6 : f32
    %132 = vector.broadcast %cst_49 : f32 to vector<18x1xf32>
    %133 = arith.addf %131, %132 : vector<18x1xf32>
    %134 = math.rsqrt %133 : vector<18x1xf32>
    %135 = vector.broadcast %134 : vector<18x1xf32> to vector<18x32xf32>
    %136 = arith.mulf %126, %135 : vector<18x32xf32>
    %137 = vector.broadcast %3 : vector<1x32xf32> to vector<18x32xf32>
    %138 = arith.mulf %136, %137 : vector<18x32xf32>
    %139 = vector.broadcast %4 : vector<1x32xf32> to vector<18x32xf32>
    %140 = arith.addf %138, %139 : vector<18x32xf32>
    %c0_50 = arith.constant 0 : index
    %c192 = arith.constant 192 : index
    %141 = vector.load %arg2[%c0_50, %c192] : memref<32x320xf32, #tpu.memory_space<vmem>>, vector<32x128xf32>
    %cst_51 = arith.constant dense<0.000000e+00> : vector<18x128xf32>
    %142 = tpu.matmul %140, %141, %cst_51 {dimension_numbers = #tpu.dot_dimension_numbers<[1], [0], [0], [1], [0, 0, 1, 1], [], []>} : vector<18x32xf32>, vector<32x128xf32>, vector<18x128xf32> -> vector<18x128xf32>
    %143 = vector.broadcast %9 : vector<1x128xf32> to vector<18x128xf32>
    %144 = arith.addf %142, %143 : vector<18x128xf32>
    %cst_52 = arith.constant 5.000000e-01 : f32
    %145 = vector.broadcast %cst_52 : f32 to vector<18x128xf32>
    %146 = arith.mulf %145, %144 : vector<18x128xf32>
    %cst_53 = arith.constant 0.707106769 : f32
    %147 = vector.broadcast %cst_53 : f32 to vector<18x128xf32>
    %148 = arith.mulf %144, %147 : vector<18x128xf32>
    %149 = math.erf %148 : vector<18x128xf32>
    %cst_54 = arith.constant 1.000000e+00 : f32
    %150 = vector.broadcast %cst_54 : f32 to vector<18x128xf32>
    %151 = arith.addf %150, %149 : vector<18x128xf32>
    %152 = arith.mulf %146, %151 : vector<18x128xf32>
    %c0_55 = arith.constant 0 : index
    %c0_56 = arith.constant 0 : index
    %153 = vector.load %arg3[%c0_55, %c0_56] : memref<128x32xf32, #tpu.memory_space<vmem>>, vector<128x32xf32>
    %cst_57 = arith.constant dense<0.000000e+00> : vector<18x32xf32>
    %154 = tpu.matmul %152, %153, %cst_57 {dimension_numbers = #tpu.dot_dimension_numbers<[1], [0], [0], [1], [0, 0, 1, 1], [], []>} : vector<18x128xf32>, vector<128x32xf32>, vector<18x32xf32> -> vector<18x32xf32>
    %155 = vector.broadcast %8 : vector<1x32xf32> to vector<18x32xf32>
    %156 = arith.addf %154, %155 : vector<18x32xf32>
    %157 = vector.broadcast %7 : vector<1x32xf32> to vector<18x32xf32>
    %158 = arith.mulf %157, %156 : vector<18x32xf32>
    %159 = arith.addf %120, %158 : vector<18x32xf32>
    %c0_58 = arith.constant 0 : index
    %c0_59 = arith.constant 0 : index
    %160 = vector.load %arg7[%c0_58, %c0_59] : memref<18x32xf32, #tpu.memory_space<vmem>>, vector<18x32xf32>
    tpu.vector_store %arg7[%c0_58, %c0_59], %159 {strides = array<i32>} : memref<18x32xf32, #tpu.memory_space<vmem>>, vector<18x32xf32>,
    return
  }
  func.func @transform_0(%arg0: i32) -> (i32, i32) {
    %c0_i32 = arith.constant 0 : i32
    %c0_i32_0 = arith.constant 0 : i32
    %c0_i32_1 = arith.constant 0 : i32
    return %c0_i32, %c0_i32_0 : i32, i32
  }
  func.func @transform_1(%arg0: i32) -> (i32, i32) {
    %c0_i32 = arith.constant 0 : i32
    %c0_i32_0 = arith.constant 0 : i32
    %c0_i32_1 = arith.constant 0 : i32
    return %c0_i32, %c0_i32_0 : i32, i32
  }
  func.func @transform_2(%arg0: i32) -> (i32, i32) {
    %c0_i32 = arith.constant 0 : i32
    %c0_i32_0 = arith.constant 0 : i32
    %c0_i32_1 = arith.constant 0 : i32
    return %c0_i32, %c0_i32_0 : i32, i32
  }
  func.func @transform_3(%arg0: i32) -> (i32, i32) {
    %c0_i32 = arith.constant 0 : i32
    %c0_i32_0 = arith.constant 0 : i32
    %c0_i32_1 = arith.constant 0 : i32
    return %c0_i32, %c0_i32_0 : i32, i32
  }
  func.func @transform_4(%arg0: i32) -> (i32, i32) {
    %c0_i32 = arith.constant 0 : i32
    %c0_i32_0 = arith.constant 0 : i32
    %c0_i32_1 = arith.constant 0 : i32
    return %c0_i32, %c0_i32_0 : i32, i32
  }
  func.func @transform_5(%arg0: i32) -> (i32, i32) {
    %c0_i32 = arith.constant 0 : i32
    %c0_i32_0 = arith.constant 0 : i32
    %c0_i32_1 = arith.constant 0 : i32
    return %c0_i32, %c0_i32_0 : i32, i32
  }
  func.func @transform_6(%arg0: i32) -> (i32, i32) {
    %c0_i32 = arith.constant 0 : i32
    %c0_i32_0 = arith.constant 0 : i32
    %c0_i32_1 = arith.constant 0 : i32
    return %c0_i32, %c0_i32_0 : i32, i32
  }
}

</mosaic_0001>

<llo_original>
// kernel: tpu_custom_call.1
$region0: #{tpu_custom_call.1}
  #allocation0 [shape = 'u32[]', space=smem, size = 0x4, offset = 0x4, fixed_abs, tag = 'smem constant byte address 0x4 - core index']
  #allocation1 [shape = 'u32[144,128]{1,0:T(1,128)}', space=vmem, size = 0x12000, scoped, tag = 'internal scratch']
  %s0 = inlined_call_operand.vmem [shape: f32[18,32], index: 0, kind: input, shape index: {}]
  %s1 = inlined_call_operand.vmem [shape: f32[32,320], index: 1, kind: input, shape index: {}]
  %s2 = inlined_call_operand.vmem [shape: f32[128,32], index: 2, kind: input, shape index: {}]
  %s3 = inlined_call_operand.hbm [shape: f32[9,128], index: 3, kind: input, shape index: {}]
  %s4 = inlined_call_operand.vmem [shape: f32[18,128], index: 4, kind: input, shape index: {}]
  %s5 = inlined_call_operand.vmem [shape: f32[18,18], index: 5, kind: input, shape index: {}]
  %s6 = inlined_call_operand.hbm [shape: f32[18,32], index: 6, kind: output, shape index: {}]
  %s7 = sld [smem:[#allocation0]]
  $region38: #{tpu_custom_call.1} parent=0
    _
  %s9 = ssub.s32 1, %s7
  %s10 = scalar_select 0, %s9, %s7
  $region1: #{tpu_custom_call.1} parent=0
    #allocation2 [shape = 'u8[8192]{0}', space=vmem, size = 0x2000, scoped, tag = 'input window, operand 3, single buffered']
    #allocation3 [shape = 's32[1]{0}', space=sflag, size = 0x4, scoped, tag = 'scoped memory for tpu_custom_call.1']
    #allocation4 [shape = 's32[1]{0}', space=sflag, size = 0x4, scoped, tag = 'scoped memory for tpu_custom_call.1']
    #allocation5 [shape = 'u8[12288]{0}', space=vmem, size = 0x3000, scoped, tag = 'output window, operand 0, single buffered']
    %11 = vsyncpa [#allocation3], 0
    %12 = vsyncpa [#allocation4], 0
    // Predicated region
    $region2: #{tpu_custom_call.1} parent=1 // pred_check
      _
    $region3: #{tpu_custom_call.1} parent=1 // pred_check_branch
      %14 = sbr.rel (0) target = $region5
    $region4: #{tpu_custom_call.1} parent=1 // pred_region
      _
    $region5: #{tpu_custom_call.1} parent=1 // pred_fallthru
      _
    // Predicated region
    $region6: #{tpu_custom_call.1} parent=1 // pred_check
      _
    $region7: #{tpu_custom_call.1} parent=1 // pred_check_branch
      %16 = sbr.rel (0) target = $region9
    $region8: #{tpu_custom_call.1} parent=1 // pred_region
      _
    $region9: #{tpu_custom_call.1} parent=1 // pred_fallthru
      _
    // Predicated region
    $region10: #{tpu_custom_call.1} parent=1 // pred_check
      _
    $region11: #{tpu_custom_call.1} parent=1 // pred_check_branch
      %18 = sbr.rel (0) target = $region13
    $region12: #{tpu_custom_call.1} parent=1 // pred_region
      _
    $region13: #{tpu_custom_call.1} parent=1 // pred_fallthru
      _
    // Predicated region
    $region14: #{tpu_custom_call.1} parent=1 // pred_check
      _
    $region15: #{tpu_custom_call.1} parent=1 // pred_check_branch
      %20 = sbr.rel (0) target = $region17
    $region16: #{tpu_custom_call.1} parent=1 // pred_region
      %s22 = ssub.s32 256, 256
      %23 = vsyncadd [#allocation3], %s22
      %s24 = sshll.u32 [#allocation2], 4
      %s25 = int_to_ptr.vmem [resolvable:$true] %s24
      %30 = dma.hbm_to_vmem [thread:$0]  %s3, 256, %s25, [#allocation3], 128, 128, 8
    $region17: #{tpu_custom_call.1} parent=1 // pred_fallthru
      _
    // Predicated region
    $region18: #{tpu_custom_call.1} parent=1 // pred_check
      _
    $region19: #{tpu_custom_call.1} parent=1 // pred_check_branch
      %32 = sbr.rel (0) target = $region21
    $region20: #{tpu_custom_call.1} parent=1 // pred_region
      _
    $region21: #{tpu_custom_call.1} parent=1 // pred_fallthru
      _
    // Predicated region
    $region22: #{tpu_custom_call.1} parent=1 // pred_check
      _
    $region23: #{tpu_custom_call.1} parent=1 // pred_check_branch
      %34 = sbr.rel (0) target = $region25
    $region24: #{tpu_custom_call.1} parent=1 // pred_region
      _
    $region25: #{tpu_custom_call.1} parent=1 // pred_fallthru
      _
    // Predicated region
    $region26: #{tpu_custom_call.1} parent=1 // pred_check
      _
    $region27: #{tpu_custom_call.1} parent=1 // pred_check_branch
      %36 = sbr.rel (0) target = $region29
    $region28: #{tpu_custom_call.1} parent=1 // pred_region
      %37 = dma.done [#allocation3], 256
    $region29: #{tpu_custom_call.1} parent=1 // pred_fallthru
      _
    %v38 = vld [vmem:[%s0] sm:$0xff]
    %v39 = vld [vmem:[%s0 + $0x8] sm:$0xff]
    %v40 = vld [vmem:[%s0 + $0x10] sm:$0x3]
    %v41 = vld [vmem:[#allocation2] sm:$0x1]
    %v42 = vld [vmem:[#allocation2 + $0x1] sm:$0x1]
    %v43 = vld [vmem:[#allocation2 + $0x2] sm:$0x1]
    %v44 = vld [vmem:[#allocation2 + $0x3] sm:$0x1]
    %v45 = vld [vmem:[#allocation2 + $0x4] sm:$0x1]
    %v46 = vld [vmem:[#allocation2 + $0x5] sm:$0x1]
    %v47 = vld [vmem:[#allocation2 + $0x6] sm:$0x1]
    %v48 = vld [vmem:[#allocation2 + $0x7] sm:$0x1]
    %v49 = vld [vmem:[#allocation2 + $0x8] sm:$0x1]
    %vm50 = vcmask 261120
    %v51 = vsel %vm50, %v38, 0.0
    %52 = vadd.xlane.f32.xlu0 %v51
    %v53 = vpop.xlane.xlu0 %52
    %v54 = vsel %vm50, %v39, 0.0
    %55 = vadd.xlane.f32.xlu0 %v54
    %v56 = vpop.xlane.xlu0 %55
    %vm57 = vcmask 254976
    %v58 = vsel %vm57, %v40, 0.0
    %59 = vadd.xlane.f32.xlu0 %v58
    %v60 = vpop.xlane.xlu0 %59
    %v61 = vrcp.pop 32.0
    %v62 = vmul.f32 %v53, %v61
    %v63 = vmul.f32 %v56, %v61
    %v64 = vmul.f32 %v60, %v61
    %v65 = vsub.f32 %v38, %v62
    %v66 = vsub.f32 %v39, %v63
    %v67 = vsub.f32 %v40, %v64
    %v68 = vmul.f32 %v65, %v65
    %v69 = vmul.f32 %v66, %v66
    %v70 = vmul.f32 %v67, %v67
    %v71 = vsel %vm50, %v68, 0.0
    %72 = vadd.xlane.f32.xlu0 %v71
    %v73 = vpop.xlane.xlu0 %72
    %v74 = vsel %vm50, %v69, 0.0
    %75 = vadd.xlane.f32.xlu0 %v74
    %v76 = vpop.xlane.xlu0 %75
    %v77 = vsel %vm57, %v70, 0.0
    %78 = vadd.xlane.f32.xlu0 %v77
    %v79 = vpop.xlane.xlu0 %78
    %v80 = vmul.f32 %v73, %v61
    %v81 = vmul.f32 %v76, %v61
    %v82 = vmul.f32 %v79, %v61
    %v83 = vadd.f32 %v80, 1e-05
    %v84 = vadd.f32 %v81, 1e-05
    %v85 = vadd.f32 %v82, 1e-05
    %v86 = vrsqrt.pop %v83
    %v87 = vrsqrt.pop %v84
    %v88 = vrsqrt.pop %v85
    %v89 = vmul.f32 %v65, %v86
    %v90 = vmul.f32 %v66, %v87
    %v91 = vmul.f32 %v67, %v88
    %v92 = vlaneseq
    %v93 = vshrl.u32 %v92, 7
    %v94 = vsub.s32 0, %v93
    %v95 = vrot.slane %v41, %v94
    %v96 = vmul.f32 %v89, %v95
    %v97 = vmul.f32 %v90, %v95
    %v98 = vmul.f32 %v91, %v95
    %v99 = vlaneseq
    %v100 = vshrl.u32 %v99, 7
    %v101 = vsub.s32 0, %v100
    %v102 = vrot.slane %v42, %v101
    %v103 = vadd.f32 %v96, %v102
    %v104 = vadd.f32 %v97, %v102
    %v105 = vadd.f32 %v98, %v102
    %v106 = vld [vmem:[%s1] sm:$0xff]
    %v107 = vld [vmem:[%s1 + $0x8] sm:$0xff]
    %v108 = vld [vmem:[%s1 + $0x18] sm:$0xff]
    %v109 = vld [vmem:[%s1 + $0x20] sm:$0xff]
    %v110 = vld [vmem:[%s1 + $0x30] sm:$0xff]
    %v111 = vld [vmem:[%s1 + $0x38] sm:$0xff]
    %v112 = vld [vmem:[%s1 + $0x48] sm:$0xff]
    %v113 = vld [vmem:[%s1 + $0x50] sm:$0xff]
    %v115 = vsel %vm50, %v103, 0
    %v118 = vsel %vm50, %v104, 0
    %v121 = vsel %vm50, %v105, 0
    %123 = vmatprep.subr.mxu0 0.0
    %124 = vmatpush1.msra.mxu0 0.0
    %125 = vmatprep.subr.mxu0 0.0
    %126 = vmatpush1.msra.mxu0 0.0
    %127 = vmatprep.subr.mxu0 0.0
    %128 = vmatpush1.msra.mxu0 0.0
    %129 = vmatprep.subr.mxu0 0.0
    %130 = vmatpush1.msra.mxu0 0.0
    %131 = vmatprep.subr.mxu0 0.0
    %132 = vmatpush1.msra.mxu0 0.0
    %133 = vmatprep.subr.mxu0 0.0
    %134 = vmatpush1.msra.mxu0 0.0
    %135 = vmatprep.subr.mxu0 0.0
    %136 = vmatpush1.msra.mxu0 0.0
    %137 = vmatprep.subr.mxu0 0.0
    %138 = vmatpush1.msra.mxu0 0.0
    %139 = vmatprep.subr.mxu0 0.0
    %140 = vmatpush1.msra.mxu0 0.0
    %141 = vmatprep.subr.mxu0 0.0
    %142 = vmatpush1.msra.mxu0 0.0
    %143 = vmatprep.subr.mxu0 0.0
    %144 = vmatpush1.msra.mxu0 0.0
    %145 = vmatprep.subr.mxu0 0.0
    %146 = vmatpush1.msra.mxu0 0.0
    %147 = vmatprep.subr.mxu0 %v113
    %148 = vmatpush1.msra.mxu0 %v112
    %149 = vmatprep.subr.mxu0 %v111
    %150 = vmatpush1.msra.mxu0 %v110
    %151 = vmatprep.subr.mxu0 %v109
    %152 = vmatpush1.msra.mxu0 %v108
    %153 = vmatprep.subr.mxu0 %v107
    %154 = vmatpush1.msra.mxu0 %v106
    %155 = vmatprep.subr.mxu0 0.0
    %156 = vmatpush2.msra.mxu0 0.0
    %157 = vmatprep.subr.mxu0 0.0
    %158 = vmatpush2.msra.mxu0 0.0
    %159 = vmatprep.subr.mxu0 0.0
    %160 = vmatpush2.msra.mxu0 0.0
    %161 = vmatprep.subr.mxu0 0.0
    %162 = vmatpush2.msra.mxu0 0.0
    %163 = vmatprep.subr.mxu0 0.0
    %164 = vmatpush2.msra.mxu0 0.0
    %165 = vmatprep.subr.mxu0 0.0
    %166 = vmatpush2.msra.mxu0 0.0
    %167 = vmatprep.subr.mxu0 0.0
    %168 = vmatpush2.msra.mxu0 0.0
    %169 = vmatprep.subr.mxu0 0.0
    %170 = vmatpush2.msra.mxu0 0.0
    %171 = vmatprep.subr.mxu0 0.0
    %172 = vmatpush2.msra.mxu0 0.0
    %173 = vmatprep.subr.mxu0 0.0
    %174 = vmatpush2.msra.mxu0 0.0
    %175 = vmatprep.subr.mxu0 0.0
    %176 = vmatpush2.msra.mxu0 0.0
    %177 = vmatprep.subr.mxu0 0.0
    %178 = vmatpush2.msra.mxu0 0.0
    %179 = vmatprep.subr.mxu0 0.0
    %180 = vmatpush2.msra.mxu0 0.0
    %181 = vmatprep.subr.mxu0 0.0
    %182 = vmatpush2.msra.mxu0 0.0
    %183 = vmatprep.subr.mxu0 0.0
    %184 = vmatpush2.msra.mxu0 0.0
    %185 = vmatprep.subr.mxu0 0.0
    %186 = vmatpush2.msra.mxu0 0.0
    %187 = vmatprep.mubr.f32.mxu0 0.0
    %188 = vmatmul.mubr.f32.gmra.mxu0 %v115
    %v189 = vpop.f32.mrf.mxu0
    %v190 = vadd.f32 0.0, %v189
    %v191 = vpop.f32.mrf.mxu0
    %v192 = vadd.f32 0.0, %v191
    %193 = vmatprep.mubr.f32.mxu0 0.0
    %194 = vmatmul.mubr.f32.gmra.mxu0 %v118
    %v195 = vpop.f32.mrf.mxu0
    %v196 = vadd.f32 0.0, %v195
    %v197 = vpop.f32.mrf.mxu0
    %v198 = vadd.f32 0.0, %v197
    %199 = vmatprep.mubr.f32.mxu0 0.0
    %200 = vmatmul.mubr.f32.gmra.mxu0 %v121
    %v201 = vpop.f32.mrf.mxu0
    %v202 = vadd.f32 0.0, %v201
    %v203 = vpop.f32.mrf.mxu0
    %v204 = vadd.f32 0.0, %v203
    %205 = vdwg.mxu0
    %v206 = vld [vmem:[%s4] sm:$0xff]
    %v207 = vld [vmem:[%s4 + $0x8] sm:$0xff]
    %v208 = vld [vmem:[%s4 + $0x10] sm:$0x3]
    %v209 = vmul.f32 %v190, %v206
    %v210 = vmul.f32 %v196, %v207
    %v211 = vmul.f32 %v202, %v208
    %215 = vrot.lane.b32.xlu0 %v206, 32
    %v216 = vpop.permute.xlu0 %215
    %217 = vrot.lane.b32.xlu0 %v207, 32
    %v218 = vpop.permute.xlu0 %217
    %219 = vrot.lane.b32.xlu0 %v208, 32
    %v220 = vpop.permute.xlu0 %219
    %v224 = vmul.f32 %v190, %v216
    %v225 = vmul.f32 %v192, %v216
    %v226 = vmul.f32 %v196, %v218
    %v227 = vmul.f32 %v198, %v218
    %v228 = vmul.f32 %v202, %v220
    %v229 = vmul.f32 %v204, %v220
    %236 = vrot.lane.b32.xlu0 %v224, 32
    %v237 = vpop.permute.xlu0 %236
    %238 = vrot.lane.b32.xlu0 %v225, 32
    %v239 = vpop.permute.xlu0 %238
    %240 = vrot.lane.b32.xlu0 %v226, 32
    %v241 = vpop.permute.xlu0 %240
    %242 = vrot.lane.b32.xlu0 %v227, 32
    %v243 = vpop.permute.xlu0 %242
    %244 = vrot.lane.b32.xlu0 %v228, 32
    %v245 = vpop.permute.xlu0 %244
    %246 = vrot.lane.b32.xlu0 %v229, 32
    %v247 = vpop.permute.xlu0 %246
    %v248 = vsel %vm50, %v237, %v239
    %v249 = vsel %vm50, %v241, %v243
    %v250 = vsel %vm50, %v245, %v247
    %v254 = vadd.f32 %v209, %v248
    %v255 = vadd.f32 %v210, %v249
    %v256 = vadd.f32 %v211, %v250
    %v257 = vld [vmem:[%s5] sm:$0xff]
    %v258 = vld [vmem:[%s5 + $0x8] sm:$0xff]
    %v259 = vld [vmem:[%s5 + $0x10] sm:$0x3]
    %v260 = vmul.f32 %v254, 0.35355338
    %v261 = vmul.f32 %v255, 0.35355338
    %v262 = vmul.f32 %v256, 0.35355338
    %266 = vrot.lane.b32.xlu0 %v254, 96
    %v267 = vpop.permute.xlu0 %266
    %268 = vrot.lane.b32.xlu0 %v255, 96
    %v269 = vpop.permute.xlu0 %268
    %270 = vrot.lane.b32.xlu0 %v256, 96
    %v271 = vpop.permute.xlu0 %270
    %vm272 = vcmask 64512
    %v274 = vsel %vm272, %v260, 0
    %v277 = vsel %vm272, %v261, 0
    %v280 = vsel %vm272, %v262, 0
    %v282 = vsel %vm272, %v267, 0
    %v284 = vsel %vm272, %v269, 0
    %v286 = vsel %vm272, %v271, 0
    %288 = vmatprep.subr.mxu0 0.0
    %289 = vmatpush1.xpose.msra.mxu0 0.0
    %290 = vmatprep.subr.mxu0 0.0
    %291 = vmatpush1.xpose.msra.mxu0 0.0
    %292 = vmatprep.subr.mxu0 0.0
    %293 = vmatpush1.xpose.msra.mxu0 0.0
    %294 = vmatprep.subr.mxu0 0.0
    %295 = vmatpush1.xpose.msra.mxu0 0.0
    %296 = vmatprep.subr.mxu0 0.0
    %297 = vmatpush1.xpose.msra.mxu0 0.0
    %298 = vmatprep.subr.mxu0 0.0
    %299 = vmatpush1.xpose.msra.mxu0 0.0
    %300 = vmatprep.subr.mxu0 0.0
    %301 = vmatpush1.xpose.msra.mxu0 0.0
    %302 = vmatprep.subr.mxu0 0.0
    %303 = vmatpush1.xpose.msra.mxu0 0.0
    %304 = vmatprep.subr.mxu0 0.0
    %305 = vmatpush1.xpose.msra.mxu0 0.0
    %306 = vmatprep.subr.mxu0 0.0
    %307 = vmatpush1.xpose.msra.mxu0 0.0
    %308 = vmatprep.subr.mxu0 0.0
    %309 = vmatpush1.xpose.msra.mxu0 0.0
    %310 = vmatprep.subr.mxu0 0.0
    %311 = vmatpush1.xpose.msra.mxu0 0.0
    %312 = vmatprep.subr.mxu0 0.0
    %313 = vmatpush1.xpose.msra.mxu0 0.0
    %314 = vmatprep.subr.mxu0 0.0
    %315 = vmatpush1.xpose.msra.mxu0 %v286
    %316 = vmatprep.subr.mxu0 0.0
    %317 = vmatpush1.xpose.msra.mxu0 %v284
    %318 = vmatprep.subr.mxu0 0.0
    %319 = vmatpush1.xpose.msra.mxu0 %v282
    %320 = vmatprep.subr.mxu0 0.0
    %321 = vmatpush2.xpose.msra.mxu0 0.0
    %322 = vmatprep.subr.mxu0 0.0
    %323 = vmatpush2.xpose.msra.mxu0 0.0
    %324 = vmatprep.subr.mxu0 0.0
    %325 = vmatpush2.xpose.msra.mxu0 0.0
    %326 = vmatprep.subr.mxu0 0.0
    %327 = vmatpush2.xpose.msra.mxu0 0.0
    %328 = vmatprep.subr.mxu0 0.0
    %329 = vmatpush2.xpose.msra.mxu0 0.0
    %330 = vmatprep.subr.mxu0 0.0
    %331 = vmatpush2.xpose.msra.mxu0 0.0
    %332 = vmatprep.subr.mxu0 0.0
    %333 = vmatpush2.xpose.msra.mxu0 0.0
    %334 = vmatprep.subr.mxu0 0.0
    %335 = vmatpush2.xpose.msra.mxu0 0.0
    %336 = vmatprep.subr.mxu0 0.0
    %337 = vmatpush2.xpose.msra.mxu0 0.0
    %338 = vmatprep.subr.mxu0 0.0
    %339 = vmatpush2.xpose.msra.mxu0 0.0
    %340 = vmatprep.subr.mxu0 0.0
    %341 = vmatpush2.xpose.msra.mxu0 0.0
    %342 = vmatprep.subr.mxu0 0.0
    %343 = vmatpush2.xpose.msra.mxu0 0.0
    %344 = vmatprep.subr.mxu0 0.0
    %345 = vmatpush2.xpose.msra.mxu0 0.0
    %346 = vmatprep.subr.mxu0 0.0
    %347 = vmatpush2.xpose.msra.mxu0 0.0
    %348 = vmatprep.subr.mxu0 0.0
    %349 = vmatpush2.xpose.msra.mxu0 0.0
    %350 = vmatprep.subr.mxu0 0.0
    %351 = vmatpush2.xpose.msra.mxu0 0.0
    %352 = vmatprep.mubr.f32.mxu0 0.0
    %353 = vmatmul.mubr.f32.gmra.mxu0 %v274
    %v354 = vpop.f32.mrf.mxu0
    %v355 = vadd.f32 %v257, %v354
    %v356 = vpop.f32.mrf.mxu0
    %357 = vmatprep.mubr.f32.mxu0 0.0
    %358 = vmatmul.mubr.f32.gmra.mxu0 %v277
    %v359 = vpop.f32.mrf.mxu0
    %v360 = vadd.f32 %v258, %v359
    %v361 = vpop.f32.mrf.mxu0
    %362 = vmatprep.mubr.f32.mxu0 0.0
    %363 = vmatmul.mubr.f32.gmra.mxu0 %v280
    %v364 = vpop.f32.mrf.mxu0
    %v365 = vadd.f32 %v259, %v364
    %v366 = vpop.f32.mrf.mxu0
    %367 = vdwg.mxu0
    %vm368 = vcmask 146432
    %v369 = vsel %vm368, %v355, -inf
    %370 = vmax.xlane.f32.xlu0 %v369
    %v371 = vpop.xlane.xlu0 %370
    %v372 = vsel %vm368, %v360, -inf
    %373 = vmax.xlane.f32.xlu0 %v372
    %v374 = vpop.xlane.xlu0 %373
    %vm375 = vcmask 140288
    %v376 = vsel %vm375, %v365, -inf
    %377 = vmax.xlane.f32.xlu0 %v376
    %v378 = vpop.xlane.xlu0 %377
    %v379 = vsub.f32 %v355, %v371
    %v380 = vsub.f32 %v360, %v374
    %v381 = vsub.f32 %v365, %v378
    %v382 = vmul.f32 %v379, 1.442695
    %v383 = vpow.pop %v382
    %v384 = vmul.f32 %v380, 1.442695
    %v385 = vpow.pop %v384
    %v386 = vmul.f32 %v381, 1.442695
    %v387 = vpow.pop %v386
    %v388 = vsel %vm368, %v383, 0.0
    %389 = vadd.xlane.f32.xlu0 %v388
    %v390 = vpop.xlane.xlu0 %389
    %v391 = vsel %vm368, %v385, 0.0
    %392 = vadd.xlane.f32.xlu0 %v391
    %v393 = vpop.xlane.xlu0 %392
    %v394 = vsel %vm375, %v387, 0.0
    %395 = vadd.xlane.f32.xlu0 %v394
    %v396 = vpop.xlane.xlu0 %395
    %v397 = vrcp.pop %v390
    %v398 = vrcp.pop %v393
    %v399 = vrcp.pop %v396
    %v400 = vmul.f32 %v383, %v397
    %v401 = vmul.f32 %v385, %v398
    %v402 = vmul.f32 %v387, %v399
    %406 = vrot.lane.b32.xlu0 %v190, 64
    %v407 = vpop.permute.xlu0 %406
    %408 = vrot.lane.b32.xlu0 %v196, 64
    %v409 = vpop.permute.xlu0 %408
    %410 = vrot.lane.b32.xlu0 %v202, 64
    %v411 = vpop.permute.xlu0 %410
    %v415 = vsel %vm368, %v400, 0
    %v418 = vsel %vm368, %v401, 0
    %v421 = vsel %vm368, %v402, 0
    %vm423 = vcmask 1041408
    %v424 = vsel %vm423, %v411, 0
    %426 = vmatprep.subr.mxu0 0.0
    %427 = vmatpush1.msra.mxu0 0.0
    %428 = vmatprep.subr.mxu0 0.0
    %429 = vmatpush1.msra.mxu0 0.0
    %430 = vmatprep.subr.mxu0 0.0
    %431 = vmatpush1.msra.mxu0 0.0
    %432 = vmatprep.subr.mxu0 0.0
    %433 = vmatpush1.msra.mxu0 0.0
    %434 = vmatprep.subr.mxu0 0.0
    %435 = vmatpush1.msra.mxu0 0.0
    %436 = vmatprep.subr.mxu0 0.0
    %437 = vmatpush1.msra.mxu0 0.0
    %438 = vmatprep.subr.mxu0 0.0
    %439 = vmatpush1.msra.mxu0 0.0
    %440 = vmatprep.subr.mxu0 0.0
    %441 = vmatpush1.msra.mxu0 0.0
    %442 = vmatprep.subr.mxu0 0.0
    %443 = vmatpush1.msra.mxu0 0.0
    %444 = vmatprep.subr.mxu0 0.0
    %445 = vmatpush1.msra.mxu0 0.0
    %446 = vmatprep.subr.mxu0 0.0
    %447 = vmatpush1.msra.mxu0 0.0
    %448 = vmatprep.subr.mxu0 0.0
    %449 = vmatpush1.msra.mxu0 0.0
    %450 = vmatprep.subr.mxu0 0.0
    %451 = vmatpush1.msra.mxu0 0.0
    %452 = vmatprep.subr.mxu0 0.0
    %453 = vmatpush1.msra.mxu0 %v424
    %454 = vmatprep.subr.mxu0 0.0
    %455 = vmatpush1.msra.mxu0 %v409
    %456 = vmatprep.subr.mxu0 0.0
    %457 = vmatpush1.msra.mxu0 %v407
    %458 = vmatprep.subr.mxu0 0.0
    %459 = vmatpush2.msra.mxu0 0.0
    %460 = vmatprep.subr.mxu0 0.0
    %461 = vmatpush2.msra.mxu0 0.0
    %462 = vmatprep.subr.mxu0 0.0
    %463 = vmatpush2.msra.mxu0 0.0
    %464 = vmatprep.subr.mxu0 0.0
    %465 = vmatpush2.msra.mxu0 0.0
    %466 = vmatprep.subr.mxu0 0.0
    %467 = vmatpush2.msra.mxu0 0.0
    %468 = vmatprep.subr.mxu0 0.0
    %469 = vmatpush2.msra.mxu0 0.0
    %470 = vmatprep.subr.mxu0 0.0
    %471 = vmatpush2.msra.mxu0 0.0
    %472 = vmatprep.subr.mxu0 0.0
    %473 = vmatpush2.msra.mxu0 0.0
    %474 = vmatprep.subr.mxu0 0.0
    %475 = vmatpush2.msra.mxu0 0.0
    %476 = vmatprep.subr.mxu0 0.0
    %477 = vmatpush2.msra.mxu0 0.0
    %478 = vmatprep.subr.mxu0 0.0
    %479 = vmatpush2.msra.mxu0 0.0
    %480 = vmatprep.subr.mxu0 0.0
    %481 = vmatpush2.msra.mxu0 0.0
    %482 = vmatprep.subr.mxu0 0.0
    %483 = vmatpush2.msra.mxu0 0.0
    %484 = vmatprep.subr.mxu0 0.0
    %485 = vmatpush2.msra.mxu0 0.0
    %486 = vmatprep.subr.mxu0 0.0
    %487 = vmatpush2.msra.mxu0 0.0
    %488 = vmatprep.subr.mxu0 0.0
    %489 = vmatpush2.msra.mxu0 0.0
    %490 = vmatprep.mubr.f32.mxu0 0.0
    %491 = vmatmul.mubr.f32.gmra.mxu0 %v415
    %v492 = vpop.f32.mrf.mxu0
    %v493 = vadd.f32 0.0, %v492
    %v494 = vpop.f32.mrf.mxu0
    %495 = vmatprep.mubr.f32.mxu0 0.0
    %496 = vmatmul.mubr.f32.gmra.mxu0 %v418
    %v497 = vpop.f32.mrf.mxu0
    %v498 = vadd.f32 0.0, %v497
    %v499 = vpop.f32.mrf.mxu0
    %500 = vmatprep.mubr.f32.mxu0 0.0
    %501 = vmatmul.mubr.f32.gmra.mxu0 %v421
    %v502 = vpop.f32.mrf.mxu0
    %v503 = vadd.f32 0.0, %v502
    %v504 = vpop.f32.mrf.mxu0
    %505 = vdwg.mxu0
    %506 = vrot.lane.b32.xlu0 %v260, 120
    %v507 = vpop.permute.xlu0 %506
    %508 = vrot.lane.b32.xlu0 %v261, 120
    %v509 = vpop.permute.xlu0 %508
    %510 = vrot.lane.b32.xlu0 %v262, 120
    %v511 = vpop.permute.xlu0 %510
    %512 = vrot.lane.b32.xlu0 %v254, 88
    %v513 = vpop.permute.xlu0 %512
    %514 = vrot.lane.b32.xlu0 %v255, 88
    %v515 = vpop.permute.xlu0 %514
    %516 = vrot.lane.b32.xlu0 %v256, 88
    %v517 = vpop.permute.xlu0 %516
    %v518 = vsel %vm272, %v507, 0
    %v520 = vsel %vm272, %v509, 0
    %v522 = vsel %vm272, %v511, 0
    %v524 = vsel %vm272, %v513, 0
    %v526 = vsel %vm272, %v515, 0
    %v528 = vsel %vm272, %v517, 0
    %530 = vmatprep.subr.mxu0 0.0
    %531 = vmatpush1.xpose.msra.mxu0 0.0
    %532 = vmatprep.subr.mxu0 0.0
    %533 = vmatpush1.xpose.msra.mxu0 0.0
    %534 = vmatprep.subr.mxu0 0.0
    %535 = vmatpush1.xpose.msra.mxu0 0.0
    %536 = vmatprep.subr.mxu0 0.0
    %537 = vmatpush1.xpose.msra.mxu0 0.0
    %538 = vmatprep.subr.mxu0 0.0
    %539 = vmatpush1.xpose.msra.mxu0 0.0
    %540 = vmatprep.subr.mxu0 0.0
    %541 = vmatpush1.xpose.msra.mxu0 0.0
    %542 = vmatprep.subr.mxu0 0.0
    %543 = vmatpush1.xpose.msra.mxu0 0.0
    %544 = vmatprep.subr.mxu0 0.0
    %545 = vmatpush1.xpose.msra.mxu0 0.0
    %546 = vmatprep.subr.mxu0 0.0
    %547 = vmatpush1.xpose.msra.mxu0 0.0
    %548 = vmatprep.subr.mxu0 0.0
    %549 = vmatpush1.xpose.msra.mxu0 0.0
    %550 = vmatprep.subr.mxu0 0.0
    %551 = vmatpush1.xpose.msra.mxu0 0.0
    %552 = vmatprep.subr.mxu0 0.0
    %553 = vmatpush1.xpose.msra.mxu0 0.0
    %554 = vmatprep.subr.mxu0 0.0
    %555 = vmatpush1.xpose.msra.mxu0 0.0
    %556 = vmatprep.subr.mxu0 0.0
    %557 = vmatpush1.xpose.msra.mxu0 %v528
    %558 = vmatprep.subr.mxu0 0.0
    %559 = vmatpush1.xpose.msra.mxu0 %v526
    %560 = vmatprep.subr.mxu0 0.0
    %561 = vmatpush1.xpose.msra.mxu0 %v524
    %562 = vmatprep.subr.mxu0 0.0
    %563 = vmatpush2.xpose.msra.mxu0 0.0
    %564 = vmatprep.subr.mxu0 0.0
    %565 = vmatpush2.xpose.msra.mxu0 0.0
    %566 = vmatprep.subr.mxu0 0.0
    %567 = vmatpush2.xpose.msra.mxu0 0.0
    %568 = vmatprep.subr.mxu0 0.0
    %569 = vmatpush2.xpose.msra.mxu0 0.0
    %570 = vmatprep.subr.mxu0 0.0
    %571 = vmatpush2.xpose.msra.mxu0 0.0
    %572 = vmatprep.subr.mxu0 0.0
    %573 = vmatpush2.xpose.msra.mxu0 0.0
    %574 = vmatprep.subr.mxu0 0.0
    %575 = vmatpush2.xpose.msra.mxu0 0.0
    %576 = vmatprep.subr.mxu0 0.0
    %577 = vmatpush2.xpose.msra.mxu0 0.0
    %578 = vmatprep.subr.mxu0 0.0
    %579 = vmatpush2.xpose.msra.mxu0 0.0
    %580 = vmatprep.subr.mxu0 0.0
    %581 = vmatpush2.xpose.msra.mxu0 0.0
    %582 = vmatprep.subr.mxu0 0.0
    %583 = vmatpush2.xpose.msra.mxu0 0.0
    %584 = vmatprep.subr.mxu0 0.0
    %585 = vmatpush2.xpose.msra.mxu0 0.0
    %586 = vmatprep.subr.mxu0 0.0
    %587 = vmatpush2.xpose.msra.mxu0 0.0
    %588 = vmatprep.subr.mxu0 0.0
    %589 = vmatpush2.xpose.msra.mxu0 0.0
    %590 = vmatprep.subr.mxu0 0.0
    %591 = vmatpush2.xpose.msra.mxu0 0.0
    %592 = vmatprep.subr.mxu0 0.0
    %593 = vmatpush2.xpose.msra.mxu0 0.0
    %594 = vmatprep.mubr.f32.mxu0 0.0
    %595 = vmatmul.mubr.f32.gmra.mxu0 %v518
    %v596 = vpop.f32.mrf.mxu0
    %v597 = vadd.f32 %v257, %v596
    %v598 = vpop.f32.mrf.mxu0
    %599 = vmatprep.mubr.f32.mxu0 0.0
    %600 = vmatmul.mubr.f32.gmra.mxu0 %v520
    %v601 = vpop.f32.mrf.mxu0
    %v602 = vadd.f32 %v258, %v601
    %v603 = vpop.f32.mrf.mxu0
    %604 = vmatprep.mubr.f32.mxu0 0.0
    %605 = vmatmul.mubr.f32.gmra.mxu0 %v522
    %v606 = vpop.f32.mrf.mxu0
    %v607 = vadd.f32 %v259, %v606
    %v608 = vpop.f32.mrf.mxu0
    %609 = vdwg.mxu0
    %v610 = vsel %vm368, %v597, -inf
    %611 = vmax.xlane.f32.xlu0 %v610
    %v612 = vpop.xlane.xlu0 %611
    %v613 = vsel %vm368, %v602, -inf
    %614 = vmax.xlane.f32.xlu0 %v613
    %v615 = vpop.xlane.xlu0 %614
    %v616 = vsel %vm375, %v607, -inf
    %617 = vmax.xlane.f32.xlu0 %v616
    %v618 = vpop.xlane.xlu0 %617
    %v619 = vsub.f32 %v597, %v612
    %v620 = vsub.f32 %v602, %v615
    %v621 = vsub.f32 %v607, %v618
    %v622 = vmul.f32 %v619, 1.442695
    %v623 = vpow.pop %v622
    %v624 = vmul.f32 %v620, 1.442695
    %v625 = vpow.pop %v624
    %v626 = vmul.f32 %v621, 1.442695
    %v627 = vpow.pop %v626
    %v628 = vsel %vm368, %v623, 0.0
    %629 = vadd.xlane.f32.xlu0 %v628
    %v630 = vpop.xlane.xlu0 %629
    %v631 = vsel %vm368, %v625, 0.0
    %632 = vadd.xlane.f32.xlu0 %v631
    %v633 = vpop.xlane.xlu0 %632
    %v634 = vsel %vm375, %v627, 0.0
    %635 = vadd.xlane.f32.xlu0 %v634
    %v636 = vpop.xlane.xlu0 %635
    %v637 = vrcp.pop %v630
    %v638 = vrcp.pop %v633
    %v639 = vrcp.pop %v636
    %v640 = vmul.f32 %v623, %v637
    %v641 = vmul.f32 %v625, %v638
    %v642 = vmul.f32 %v627, %v639
    %643 = vrot.lane.b32.xlu0 %v190, 56
    %v644 = vpop.permute.xlu0 %643
    %645 = vrot.lane.b32.xlu0 %v196, 56
    %v646 = vpop.permute.xlu0 %645
    %647 = vrot.lane.b32.xlu0 %v202, 56
    %v648 = vpop.permute.xlu0 %647
    %v652 = vsel %vm368, %v640, 0
    %v655 = vsel %vm368, %v641, 0
    %v658 = vsel %vm368, %v642, 0
    %v660 = vsel %vm423, %v648, 0
    %662 = vmatprep.subr.mxu0 0.0
    %663 = vmatpush1.msra.mxu0 0.0
    %664 = vmatprep.subr.mxu0 0.0
    %665 = vmatpush1.msra.mxu0 0.0
    %666 = vmatprep.subr.mxu0 0.0
    %667 = vmatpush1.msra.mxu0 0.0
    %668 = vmatprep.subr.mxu0 0.0
    %669 = vmatpush1.msra.mxu0 0.0
    %670 = vmatprep.subr.mxu0 0.0
    %671 = vmatpush1.msra.mxu0 0.0
    %672 = vmatprep.subr.mxu0 0.0
    %673 = vmatpush1.msra.mxu0 0.0
    %674 = vmatprep.subr.mxu0 0.0
    %675 = vmatpush1.msra.mxu0 0.0
    %676 = vmatprep.subr.mxu0 0.0
    %677 = vmatpush1.msra.mxu0 0.0
    %678 = vmatprep.subr.mxu0 0.0
    %679 = vmatpush1.msra.mxu0 0.0
    %680 = vmatprep.subr.mxu0 0.0
    %681 = vmatpush1.msra.mxu0 0.0
    %682 = vmatprep.subr.mxu0 0.0
    %683 = vmatpush1.msra.mxu0 0.0
    %684 = vmatprep.subr.mxu0 0.0
    %685 = vmatpush1.msra.mxu0 0.0
    %686 = vmatprep.subr.mxu0 0.0
    %687 = vmatpush1.msra.mxu0 0.0
    %688 = vmatprep.subr.mxu0 0.0
    %689 = vmatpush1.msra.mxu0 %v660
    %690 = vmatprep.subr.mxu0 0.0
    %691 = vmatpush1.msra.mxu0 %v646
    %692 = vmatprep.subr.mxu0 0.0
    %693 = vmatpush1.msra.mxu0 %v644
    %694 = vmatprep.subr.mxu0 0.0
    %695 = vmatpush2.msra.mxu0 0.0
    %696 = vmatprep.subr.mxu0 0.0
    %697 = vmatpush2.msra.mxu0 0.0
    %698 = vmatprep.subr.mxu0 0.0
    %699 = vmatpush2.msra.mxu0 0.0
    %700 = vmatprep.subr.mxu0 0.0
    %701 = vmatpush2.msra.mxu0 0.0
    %702 = vmatprep.subr.mxu0 0.0
    %703 = vmatpush2.msra.mxu0 0.0
    %704 = vmatprep.subr.mxu0 0.0
    %705 = vmatpush2.msra.mxu0 0.0
    %706 = vmatprep.subr.mxu0 0.0
    %707 = vmatpush2.msra.mxu0 0.0
    %708 = vmatprep.subr.mxu0 0.0
    %709 = vmatpush2.msra.mxu0 0.0
    %710 = vmatprep.subr.mxu0 0.0
    %711 = vmatpush2.msra.mxu0 0.0
    %712 = vmatprep.subr.mxu0 0.0
    %713 = vmatpush2.msra.mxu0 0.0
    %714 = vmatprep.subr.mxu0 0.0
    %715 = vmatpush2.msra.mxu0 0.0
    %716 = vmatprep.subr.mxu0 0.0
    %717 = vmatpush2.msra.mxu0 0.0
    %718 = vmatprep.subr.mxu0 0.0
    %719 = vmatpush2.msra.mxu0 0.0
    %720 = vmatprep.subr.mxu0 0.0
    %721 = vmatpush2.msra.mxu0 0.0
    %722 = vmatprep.subr.mxu0 0.0
    %723 = vmatpush2.msra.mxu0 0.0
    %724 = vmatprep.subr.mxu0 0.0
    %725 = vmatpush2.msra.mxu0 0.0
    %726 = vmatprep.mubr.f32.mxu0 0.0
    %727 = vmatmul.mubr.f32.gmra.mxu0 %v652
    %v728 = vpop.f32.mrf.mxu0
    %v729 = vadd.f32 0.0, %v728
    %v730 = vpop.f32.mrf.mxu0
    %731 = vmatprep.mubr.f32.mxu0 0.0
    %732 = vmatmul.mubr.f32.gmra.mxu0 %v655
    %v733 = vpop.f32.mrf.mxu0
    %v734 = vadd.f32 0.0, %v733
    %v735 = vpop.f32.mrf.mxu0
    %736 = vmatprep.mubr.f32.mxu0 0.0
    %737 = vmatmul.mubr.f32.gmra.mxu0 %v658
    %v738 = vpop.f32.mrf.mxu0
    %v739 = vadd.f32 0.0, %v738
    %v740 = vpop.f32.mrf.mxu0
    %741 = vdwg.mxu0
    %742 = vrot.lane.b32.xlu0 %v260, 112
    %v743 = vpop.permute.xlu0 %742
    %744 = vrot.lane.b32.xlu0 %v261, 112
    %v745 = vpop.permute.xlu0 %744
    %746 = vrot.lane.b32.xlu0 %v262, 112
    %v747 = vpop.permute.xlu0 %746
    %748 = vrot.lane.b32.xlu0 %v254, 80
    %v749 = vpop.permute.xlu0 %748
    %750 = vrot.lane.b32.xlu0 %v255, 80
    %v751 = vpop.permute.xlu0 %750
    %752 = vrot.lane.b32.xlu0 %v256, 80
    %v753 = vpop.permute.xlu0 %752
    %v754 = vsel %vm272, %v743, 0
    %v756 = vsel %vm272, %v745, 0
    %v758 = vsel %vm272, %v747, 0
    %v760 = vsel %vm272, %v749, 0
    %v762 = vsel %vm272, %v751, 0
    %v764 = vsel %vm272, %v753, 0
    %766 = vmatprep.subr.mxu0 0.0
    %767 = vmatpush1.xpose.msra.mxu0 0.0
    %768 = vmatprep.subr.mxu0 0.0
    %769 = vmatpush1.xpose.msra.mxu0 0.0
    %770 = vmatprep.subr.mxu0 0.0
    %771 = vmatpush1.xpose.msra.mxu0 0.0
    %772 = vmatprep.subr.mxu0 0.0
    %773 = vmatpush1.xpose.msra.mxu0 0.0
    %774 = vmatprep.subr.mxu0 0.0
    %775 = vmatpush1.xpose.msra.mxu0 0.0
    %776 = vmatprep.subr.mxu0 0.0
    %777 = vmatpush1.xpose.msra.mxu0 0.0
    %778 = vmatprep.subr.mxu0 0.0
    %779 = vmatpush1.xpose.msra.mxu0 0.0
    %780 = vmatprep.subr.mxu0 0.0
    %781 = vmatpush1.xpose.msra.mxu0 0.0
    %782 = vmatprep.subr.mxu0 0.0
    %783 = vmatpush1.xpose.msra.mxu0 0.0
    %784 = vmatprep.subr.mxu0 0.0
    %785 = vmatpush1.xpose.msra.mxu0 0.0
    %786 = vmatprep.subr.mxu0 0.0
    %787 = vmatpush1.xpose.msra.mxu0 0.0
    %788 = vmatprep.subr.mxu0 0.0
    %789 = vmatpush1.xpose.msra.mxu0 0.0
    %790 = vmatprep.subr.mxu0 0.0
    %791 = vmatpush1.xpose.msra.mxu0 0.0
    %792 = vmatprep.subr.mxu0 0.0
    %793 = vmatpush1.xpose.msra.mxu0 %v764
    %794 = vmatprep.subr.mxu0 0.0
    %795 = vmatpush1.xpose.msra.mxu0 %v762
    %796 = vmatprep.subr.mxu0 0.0
    %797 = vmatpush1.xpose.msra.mxu0 %v760
    %798 = vmatprep.subr.mxu0 0.0
    %799 = vmatpush2.xpose.msra.mxu0 0.0
    %800 = vmatprep.subr.mxu0 0.0
    %801 = vmatpush2.xpose.msra.mxu0 0.0
    %802 = vmatprep.subr.mxu0 0.0
    %803 = vmatpush2.xpose.msra.mxu0 0.0
    %804 = vmatprep.subr.mxu0 0.0
    %805 = vmatpush2.xpose.msra.mxu0 0.0
    %806 = vmatprep.subr.mxu0 0.0
    %807 = vmatpush2.xpose.msra.mxu0 0.0
    %808 = vmatprep.subr.mxu0 0.0
    %809 = vmatpush2.xpose.msra.mxu0 0.0
    %810 = vmatprep.subr.mxu0 0.0
    %811 = vmatpush2.xpose.msra.mxu0 0.0
    %812 = vmatprep.subr.mxu0 0.0
    %813 = vmatpush2.xpose.msra.mxu0 0.0
    %814 = vmatprep.subr.mxu0 0.0
    %815 = vmatpush2.xpose.msra.mxu0 0.0
    %816 = vmatprep.subr.mxu0 0.0
    %817 = vmatpush2.xpose.msra.mxu0 0.0
    %818 = vmatprep.subr.mxu0 0.0
    %819 = vmatpush2.xpose.msra.mxu0 0.0
    %820 = vmatprep.subr.mxu0 0.0
    %821 = vmatpush2.xpose.msra.mxu0 0.0
    %822 = vmatprep.subr.mxu0 0.0
    %823 = vmatpush2.xpose.msra.mxu0 0.0
    %824 = vmatprep.subr.mxu0 0.0
    %825 = vmatpush2.xpose.msra.mxu0 0.0
    %826 = vmatprep.subr.mxu0 0.0
    %827 = vmatpush2.xpose.msra.mxu0 0.0
    %828 = vmatprep.subr.mxu0 0.0
    %829 = vmatpush2.xpose.msra.mxu0 0.0
    %830 = vmatprep.mubr.f32.mxu0 0.0
    %831 = vmatmul.mubr.f32.gmra.mxu0 %v754
    %v832 = vpop.f32.mrf.mxu0
    %v833 = vadd.f32 %v257, %v832
    %v834 = vpop.f32.mrf.mxu0
    %835 = vmatprep.mubr.f32.mxu0 0.0
    %836 = vmatmul.mubr.f32.gmra.mxu0 %v756
    %v837 = vpop.f32.mrf.mxu0
    %v838 = vadd.f32 %v258, %v837
    %v839 = vpop.f32.mrf.mxu0
    %840 = vmatprep.mubr.f32.mxu0 0.0
    %841 = vmatmul.mubr.f32.gmra.mxu0 %v758
    %v842 = vpop.f32.mrf.mxu0
    %v843 = vadd.f32 %v259, %v842
    %v844 = vpop.f32.mrf.mxu0
    %845 = vdwg.mxu0
    %v846 = vsel %vm368, %v833, -inf
    %847 = vmax.xlane.f32.xlu0 %v846
    %v848 = vpop.xlane.xlu0 %847
    %v849 = vsel %vm368, %v838, -inf
    %850 = vmax.xlane.f32.xlu0 %v849
    %v851 = vpop.xlane.xlu0 %850
    %v852 = vsel %vm375, %v843, -inf
    %853 = vmax.xlane.f32.xlu0 %v852
    %v854 = vpop.xlane.xlu0 %853
    %v855 = vsub.f32 %v833, %v848
    %v856 = vsub.f32 %v838, %v851
    %v857 = vsub.f32 %v843, %v854
    %v858 = vmul.f32 %v855, 1.442695
    %v859 = vpow.pop %v858
    %v860 = vmul.f32 %v856, 1.442695
    %v861 = vpow.pop %v860
    %v862 = vmul.f32 %v857, 1.442695
    %v863 = vpow.pop %v862
    %v864 = vsel %vm368, %v859, 0.0
    %865 = vadd.xlane.f32.xlu0 %v864
    %v866 = vpop.xlane.xlu0 %865
    %v867 = vsel %vm368, %v861, 0.0
    %868 = vadd.xlane.f32.xlu0 %v867
    %v869 = vpop.xlane.xlu0 %868
    %v870 = vsel %vm375, %v863, 0.0
    %871 = vadd.xlane.f32.xlu0 %v870
    %v872 = vpop.xlane.xlu0 %871
    %v873 = vrcp.pop %v866
    %v874 = vrcp.pop %v869
    %v875 = vrcp.pop %v872
    %v876 = vmul.f32 %v859, %v873
    %v877 = vmul.f32 %v861, %v874
    %v878 = vmul.f32 %v863, %v875
    %879 = vrot.lane.b32.xlu0 %v190, 48
    %v880 = vpop.permute.xlu0 %879
    %881 = vrot.lane.b32.xlu0 %v196, 48
    %v882 = vpop.permute.xlu0 %881
    %883 = vrot.lane.b32.xlu0 %v202, 48
    %v884 = vpop.permute.xlu0 %883
    %v888 = vsel %vm368, %v876, 0
    %v891 = vsel %vm368, %v877, 0
    %v894 = vsel %vm368, %v878, 0
    %v896 = vsel %vm423, %v884, 0
    %898 = vmatprep.subr.mxu0 0.0
    %899 = vmatpush1.msra.mxu0 0.0
    %900 = vmatprep.subr.mxu0 0.0
    %901 = vmatpush1.msra.mxu0 0.0
    %902 = vmatprep.subr.mxu0 0.0
    %903 = vmatpush1.msra.mxu0 0.0
    %904 = vmatprep.subr.mxu0 0.0
    %905 = vmatpush1.msra.mxu0 0.0
    %906 = vmatprep.subr.mxu0 0.0
    %907 = vmatpush1.msra.mxu0 0.0
    %908 = vmatprep.subr.mxu0 0.0
    %909 = vmatpush1.msra.mxu0 0.0
    %910 = vmatprep.subr.mxu0 0.0
    %911 = vmatpush1.msra.mxu0 0.0
    %912 = vmatprep.subr.mxu0 0.0
    %913 = vmatpush1.msra.mxu0 0.0
    %914 = vmatprep.subr.mxu0 0.0
    %915 = vmatpush1.msra.mxu0 0.0
    %916 = vmatprep.subr.mxu0 0.0
    %917 = vmatpush1.msra.mxu0 0.0
    %918 = vmatprep.subr.mxu0 0.0
    %919 = vmatpush1.msra.mxu0 0.0
    %920 = vmatprep.subr.mxu0 0.0
    %921 = vmatpush1.msra.mxu0 0.0
    %922 = vmatprep.subr.mxu0 0.0
    %923 = vmatpush1.msra.mxu0 0.0
    %924 = vmatprep.subr.mxu0 0.0
    %925 = vmatpush1.msra.mxu0 %v896
    %926 = vmatprep.subr.mxu0 0.0
    %927 = vmatpush1.msra.mxu0 %v882
    %928 = vmatprep.subr.mxu0 0.0
    %929 = vmatpush1.msra.mxu0 %v880
    %930 = vmatprep.subr.mxu0 0.0
    %931 = vmatpush2.msra.mxu0 0.0
    %932 = vmatprep.subr.mxu0 0.0
    %933 = vmatpush2.msra.mxu0 0.0
    %934 = vmatprep.subr.mxu0 0.0
    %935 = vmatpush2.msra.mxu0 0.0
    %936 = vmatprep.subr.mxu0 0.0
    %937 = vmatpush2.msra.mxu0 0.0
    %938 = vmatprep.subr.mxu0 0.0
    %939 = vmatpush2.msra.mxu0 0.0
    %940 = vmatprep.subr.mxu0 0.0
    %941 = vmatpush2.msra.mxu0 0.0
    %942 = vmatprep.subr.mxu0 0.0
    %943 = vmatpush2.msra.mxu0 0.0
    %944 = vmatprep.subr.mxu0 0.0
    %945 = vmatpush2.msra.mxu0 0.0
    %946 = vmatprep.subr.mxu0 0.0
    %947 = vmatpush2.msra.mxu0 0.0
    %948 = vmatprep.subr.mxu0 0.0
    %949 = vmatpush2.msra.mxu0 0.0
    %950 = vmatprep.subr.mxu0 0.0
    %951 = vmatpush2.msra.mxu0 0.0
    %952 = vmatprep.subr.mxu0 0.0
    %953 = vmatpush2.msra.mxu0 0.0
    %954 = vmatprep.subr.mxu0 0.0
    %955 = vmatpush2.msra.mxu0 0.0
    %956 = vmatprep.subr.mxu0 0.0
    %957 = vmatpush2.msra.mxu0 0.0
    %958 = vmatprep.subr.mxu0 0.0
    %959 = vmatpush2.msra.mxu0 0.0
    %960 = vmatprep.subr.mxu0 0.0
    %961 = vmatpush2.msra.mxu0 0.0
    %962 = vmatprep.mubr.f32.mxu0 0.0
    %963 = vmatmul.mubr.f32.gmra.mxu0 %v888
    %v964 = vpop.f32.mrf.mxu0
    %v965 = vadd.f32 0.0, %v964
    %v966 = vpop.f32.mrf.mxu0
    %967 = vmatprep.mubr.f32.mxu0 0.0
    %968 = vmatmul.mubr.f32.gmra.mxu0 %v891
    %v969 = vpop.f32.mrf.mxu0
    %v970 = vadd.f32 0.0, %v969
    %v971 = vpop.f32.mrf.mxu0
    %972 = vmatprep.mubr.f32.mxu0 0.0
    %973 = vmatmul.mubr.f32.gmra.mxu0 %v894
    %v974 = vpop.f32.mrf.mxu0
    %v975 = vadd.f32 0.0, %v974
    %v976 = vpop.f32.mrf.mxu0
    %977 = vdwg.mxu0
    %978 = vrot.lane.b32.xlu0 %v260, 104
    %v979 = vpop.permute.xlu0 %978
    %980 = vrot.lane.b32.xlu0 %v261, 104
    %v981 = vpop.permute.xlu0 %980
    %982 = vrot.lane.b32.xlu0 %v262, 104
    %v983 = vpop.permute.xlu0 %982
    %984 = vrot.lane.b32.xlu0 %v254, 72
    %v985 = vpop.permute.xlu0 %984
    %986 = vrot.lane.b32.xlu0 %v255, 72
    %v987 = vpop.permute.xlu0 %986
    %988 = vrot.lane.b32.xlu0 %v256, 72
    %v989 = vpop.permute.xlu0 %988
    %v990 = vsel %vm272, %v979, 0
    %v992 = vsel %vm272, %v981, 0
    %v994 = vsel %vm272, %v983, 0
    %v996 = vsel %vm272, %v985, 0
    %v998 = vsel %vm272, %v987, 0
    %v1000 = vsel %vm272, %v989, 0
    %1002 = vmatprep.subr.mxu0 0.0
    %1003 = vmatpush1.xpose.msra.mxu0 0.0
    %1004 = vmatprep.subr.mxu0 0.0
    %1005 = vmatpush1.xpose.msra.mxu0 0.0
    %1006 = vmatprep.subr.mxu0 0.0
    %1007 = vmatpush1.xpose.msra.mxu0 0.0
    %1008 = vmatprep.subr.mxu0 0.0
    %1009 = vmatpush1.xpose.msra.mxu0 0.0
    %1010 = vmatprep.subr.mxu0 0.0
    %1011 = vmatpush1.xpose.msra.mxu0 0.0
    %1012 = vmatprep.subr.mxu0 0.0
    %1013 = vmatpush1.xpose.msra.mxu0 0.0
    %1014 = vmatprep.subr.mxu0 0.0
    %1015 = vmatpush1.xpose.msra.mxu0 0.0
    %1016 = vmatprep.subr.mxu0 0.0
    %1017 = vmatpush1.xpose.msra.mxu0 0.0
    %1018 = vmatprep.subr.mxu0 0.0
    %1019 = vmatpush1.xpose.msra.mxu0 0.0
    %1020 = vmatprep.subr.mxu0 0.0
    %1021 = vmatpush1.xpose.msra.mxu0 0.0
    %1022 = vmatprep.subr.mxu0 0.0
    %1023 = vmatpush1.xpose.msra.mxu0 0.0
    %1024 = vmatprep.subr.mxu0 0.0
    %1025 = vmatpush1.xpose.msra.mxu0 0.0
    %1026 = vmatprep.subr.mxu0 0.0
    %1027 = vmatpush1.xpose.msra.mxu0 0.0
    %1028 = vmatprep.subr.mxu0 0.0
    %1029 = vmatpush1.xpose.msra.mxu0 %v1000
    %1030 = vmatprep.subr.mxu0 0.0
    %1031 = vmatpush1.xpose.msra.mxu0 %v998
    %1032 = vmatprep.subr.mxu0 0.0
    %1033 = vmatpush1.xpose.msra.mxu0 %v996
    %1034 = vmatprep.subr.mxu0 0.0
    %1035 = vmatpush2.xpose.msra.mxu0 0.0
    %1036 = vmatprep.subr.mxu0 0.0
    %1037 = vmatpush2.xpose.msra.mxu0 0.0
    %1038 = vmatprep.subr.mxu0 0.0
    %1039 = vmatpush2.xpose.msra.mxu0 0.0
    %1040 = vmatprep.subr.mxu0 0.0
    %1041 = vmatpush2.xpose.msra.mxu0 0.0
    %1042 = vmatprep.subr.mxu0 0.0
    %1043 = vmatpush2.xpose.msra.mxu0 0.0
    %1044 = vmatprep.subr.mxu0 0.0
    %1045 = vmatpush2.xpose.msra.mxu0 0.0
    %1046 = vmatprep.subr.mxu0 0.0
    %1047 = vmatpush2.xpose.msra.mxu0 0.0
    %1048 = vmatprep.subr.mxu0 0.0
    %1049 = vmatpush2.xpose.msra.mxu0 0.0
    %1050 = vmatprep.subr.mxu0 0.0
    %1051 = vmatpush2.xpose.msra.mxu0 0.0
    %1052 = vmatprep.subr.mxu0 0.0
    %1053 = vmatpush2.xpose.msra.mxu0 0.0
    %1054 = vmatprep.subr.mxu0 0.0
    %1055 = vmatpush2.xpose.msra.mxu0 0.0
    %1056 = vmatprep.subr.mxu0 0.0
    %1057 = vmatpush2.xpose.msra.mxu0 0.0
    %1058 = vmatprep.subr.mxu0 0.0
    %1059 = vmatpush2.xpose.msra.mxu0 0.0
    %1060 = vmatprep.subr.mxu0 0.0
    %1061 = vmatpush2.xpose.msra.mxu0 0.0
    %1062 = vmatprep.subr.mxu0 0.0
    %1063 = vmatpush2.xpose.msra.mxu0 0.0
    %1064 = vmatprep.subr.mxu0 0.0
    %1065 = vmatpush2.xpose.msra.mxu0 0.0
    %1066 = vmatprep.mubr.f32.mxu0 0.0
    %1067 = vmatmul.mubr.f32.gmra.mxu0 %v990
    %v1068 = vpop.f32.mrf.mxu0
    %v1069 = vadd.f32 %v257, %v1068
    %v1070 = vpop.f32.mrf.mxu0
    %1071 = vmatprep.mubr.f32.mxu0 0.0
    %1072 = vmatmul.mubr.f32.gmra.mxu0 %v992
    %v1073 = vpop.f32.mrf.mxu0
    %v1074 = vadd.f32 %v258, %v1073
    %v1075 = vpop.f32.mrf.mxu0
    %1076 = vmatprep.mubr.f32.mxu0 0.0
    %1077 = vmatmul.mubr.f32.gmra.mxu0 %v994
    %v1078 = vpop.f32.mrf.mxu0
    %v1079 = vadd.f32 %v259, %v1078
    %v1080 = vpop.f32.mrf.mxu0
    %1081 = vdwg.mxu0
    %v1082 = vsel %vm368, %v1069, -inf
    %1083 = vmax.xlane.f32.xlu0 %v1082
    %v1084 = vpop.xlane.xlu0 %1083
    %v1085 = vsel %vm368, %v1074, -inf
    %1086 = vmax.xlane.f32.xlu0 %v1085
    %v1087 = vpop.xlane.xlu0 %1086
    %v1088 = vsel %vm375, %v1079, -inf
    %1089 = vmax.xlane.f32.xlu0 %v1088
    %v1090 = vpop.xlane.xlu0 %1089
    %v1091 = vsub.f32 %v1069, %v1084
    %v1092 = vsub.f32 %v1074, %v1087
    %v1093 = vsub.f32 %v1079, %v1090
    %v1094 = vmul.f32 %v1091, 1.442695
    %v1095 = vpow.pop %v1094
    %v1096 = vmul.f32 %v1092, 1.442695
    %v1097 = vpow.pop %v1096
    %v1098 = vmul.f32 %v1093, 1.442695
    %v1099 = vpow.pop %v1098
    %v1100 = vsel %vm368, %v1095, 0.0
    %1101 = vadd.xlane.f32.xlu0 %v1100
    %v1102 = vpop.xlane.xlu0 %1101
    %v1103 = vsel %vm368, %v1097, 0.0
    %1104 = vadd.xlane.f32.xlu0 %v1103
    %v1105 = vpop.xlane.xlu0 %1104
    %v1106 = vsel %vm375, %v1099, 0.0
    %1107 = vadd.xlane.f32.xlu0 %v1106
    %v1108 = vpop.xlane.xlu0 %1107
    %v1109 = vrcp.pop %v1102
    %v1110 = vrcp.pop %v1105
    %v1111 = vrcp.pop %v1108
    %v1112 = vmul.f32 %v1095, %v1109
    %v1113 = vmul.f32 %v1097, %v1110
    %v1114 = vmul.f32 %v1099, %v1111
    %1115 = vrot.lane.b32.xlu0 %v190, 40
    %v1116 = vpop.permute.xlu0 %1115
    %1117 = vrot.lane.b32.xlu0 %v196, 40
    %v1118 = vpop.permute.xlu0 %1117
    %1119 = vrot.lane.b32.xlu0 %v202, 40
    %v1120 = vpop.permute.xlu0 %1119
    %v1124 = vsel %vm368, %v1112, 0
    %v1127 = vsel %vm368, %v1113, 0
    %v1130 = vsel %vm368, %v1114, 0
    %v1132 = vsel %vm423, %v1120, 0
    %1134 = vmatprep.subr.mxu0 0.0
    %1135 = vmatpush1.msra.mxu0 0.0
    %1136 = vmatprep.subr.mxu0 0.0
    %1137 = vmatpush1.msra.mxu0 0.0
    %1138 = vmatprep.subr.mxu0 0.0
    %1139 = vmatpush1.msra.mxu0 0.0
    %1140 = vmatprep.subr.mxu0 0.0
    %1141 = vmatpush1.msra.mxu0 0.0
    %1142 = vmatprep.subr.mxu0 0.0
    %1143 = vmatpush1.msra.mxu0 0.0
    %1144 = vmatprep.subr.mxu0 0.0
    %1145 = vmatpush1.msra.mxu0 0.0
    %1146 = vmatprep.subr.mxu0 0.0
    %1147 = vmatpush1.msra.mxu0 0.0
    %1148 = vmatprep.subr.mxu0 0.0
    %1149 = vmatpush1.msra.mxu0 0.0
    %1150 = vmatprep.subr.mxu0 0.0
    %1151 = vmatpush1.msra.mxu0 0.0
    %1152 = vmatprep.subr.mxu0 0.0
    %1153 = vmatpush1.msra.mxu0 0.0
    %1154 = vmatprep.subr.mxu0 0.0
    %1155 = vmatpush1.msra.mxu0 0.0
    %1156 = vmatprep.subr.mxu0 0.0
    %1157 = vmatpush1.msra.mxu0 0.0
    %1158 = vmatprep.subr.mxu0 0.0
    %1159 = vmatpush1.msra.mxu0 0.0
    %1160 = vmatprep.subr.mxu0 0.0
    %1161 = vmatpush1.msra.mxu0 %v1132
    %1162 = vmatprep.subr.mxu0 0.0
    %1163 = vmatpush1.msra.mxu0 %v1118
    %1164 = vmatprep.subr.mxu0 0.0
    %1165 = vmatpush1.msra.mxu0 %v1116
    %1166 = vmatprep.subr.mxu0 0.0
    %1167 = vmatpush2.msra.mxu0 0.0
    %1168 = vmatprep.subr.mxu0 0.0
    %1169 = vmatpush2.msra.mxu0 0.0
    %1170 = vmatprep.subr.mxu0 0.0
    %1171 = vmatpush2.msra.mxu0 0.0
    %1172 = vmatprep.subr.mxu0 0.0
    %1173 = vmatpush2.msra.mxu0 0.0
    %1174 = vmatprep.subr.mxu0 0.0
    %1175 = vmatpush2.msra.mxu0 0.0
    %1176 = vmatprep.subr.mxu0 0.0
    %1177 = vmatpush2.msra.mxu0 0.0
    %1178 = vmatprep.subr.mxu0 0.0
    %1179 = vmatpush2.msra.mxu0 0.0
    %1180 = vmatprep.subr.mxu0 0.0
    %1181 = vmatpush2.msra.mxu0 0.0
    %1182 = vmatprep.subr.mxu0 0.0
    %1183 = vmatpush2.msra.mxu0 0.0
    %1184 = vmatprep.subr.mxu0 0.0
    %1185 = vmatpush2.msra.mxu0 0.0
    %1186 = vmatprep.subr.mxu0 0.0
    %1187 = vmatpush2.msra.mxu0 0.0
    %1188 = vmatprep.subr.mxu0 0.0
    %1189 = vmatpush2.msra.mxu0 0.0
    %1190 = vmatprep.subr.mxu0 0.0
    %1191 = vmatpush2.msra.mxu0 0.0
    %1192 = vmatprep.subr.mxu0 0.0
    %1193 = vmatpush2.msra.mxu0 0.0
    %1194 = vmatprep.subr.mxu0 0.0
    %1195 = vmatpush2.msra.mxu0 0.0
    %1196 = vmatprep.subr.mxu0 0.0
    %1197 = vmatpush2.msra.mxu0 0.0
    %1198 = vmatprep.mubr.f32.mxu0 0.0
    %1199 = vmatmul.mubr.f32.gmra.mxu0 %v1124
    %v1200 = vpop.f32.mrf.mxu0
    %v1201 = vadd.f32 0.0, %v1200
    %v1202 = vpop.f32.mrf.mxu0
    %1203 = vmatprep.mubr.f32.mxu0 0.0
    %1204 = vmatmul.mubr.f32.gmra.mxu0 %v1127
    %v1205 = vpop.f32.mrf.mxu0
    %v1206 = vadd.f32 0.0, %v1205
    %v1207 = vpop.f32.mrf.mxu0
    %1208 = vmatprep.mubr.f32.mxu0 0.0
    %1209 = vmatmul.mubr.f32.gmra.mxu0 %v1130
    %v1210 = vpop.f32.mrf.mxu0
    %v1211 = vadd.f32 0.0, %v1210
    %v1212 = vpop.f32.mrf.mxu0
    %1213 = vdwg.mxu0
    %1217 = vrot.lane.b32.xlu0 %v729, 8
    %v1218 = vpop.permute.xlu0 %1217
    %1219 = vrot.lane.b32.xlu0 %v734, 8
    %v1220 = vpop.permute.xlu0 %1219
    %1221 = vrot.lane.b32.xlu0 %v739, 8
    %v1222 = vpop.permute.xlu0 %1221
    %1229 = vrot.lane.b32.xlu0 %v965, 16
    %v1230 = vpop.permute.xlu0 %1229
    %1231 = vrot.lane.b32.xlu0 %v970, 16
    %v1232 = vpop.permute.xlu0 %1231
    %1233 = vrot.lane.b32.xlu0 %v975, 16
    %v1234 = vpop.permute.xlu0 %1233
    %1241 = vrot.lane.b32.xlu0 %v1201, 24
    %v1242 = vpop.permute.xlu0 %1241
    %1243 = vrot.lane.b32.xlu0 %v1206, 24
    %v1244 = vpop.permute.xlu0 %1243
    %1245 = vrot.lane.b32.xlu0 %v1211, 24
    %v1246 = vpop.permute.xlu0 %1245
    %v1250 = vsel %vm272, %v493, %v1218
    %v1251 = vsel %vm272, %v498, %v1220
    %v1252 = vsel %vm272, %v503, %v1222
    %vm1253 = vcmask 130048
    %v1254 = vsel %vm1253, %v1250, %v1230
    %v1255 = vsel %vm1253, %v1251, %v1232
    %v1256 = vsel %vm1253, %v1252, %v1234
    %vm1257 = vcmask 195584
    %v1258 = vsel %vm1257, %v1254, %v1242
    %v1259 = vsel %vm1257, %v1255, %v1244
    %v1260 = vsel %vm1257, %v1256, %v1246
    %v1261 = vlaneseq
    %v1262 = vshrl.u32 %v1261, 7
    %v1263 = vsub.s32 0, %v1262
    %v1264 = vrot.slane %v45, %v1263
    %1269 = vrot.lane.b32.xlu0 %v107, 96
    %v1270 = vpop.permute.xlu0 %1269
    %1271 = vrot.lane.b32.xlu0 %v109, 96
    %v1272 = vpop.permute.xlu0 %1271
    %1273 = vrot.lane.b32.xlu0 %v111, 96
    %v1274 = vpop.permute.xlu0 %1273
    %1275 = vrot.lane.b32.xlu0 %v113, 96
    %v1276 = vpop.permute.xlu0 %1275
    %v1282 = vsel %vm50, %v1258, 0
    %v1285 = vsel %vm50, %v1259, 0
    %v1288 = vsel %vm50, %v1260, 0
    %1290 = vmatprep.subr.mxu0 0.0
    %1291 = vmatpush1.msra.mxu0 0.0
    %1292 = vmatprep.subr.mxu0 0.0
    %1293 = vmatpush1.msra.mxu0 0.0
    %1294 = vmatprep.subr.mxu0 0.0
    %1295 = vmatpush1.msra.mxu0 0.0
    %1296 = vmatprep.subr.mxu0 0.0
    %1297 = vmatpush1.msra.mxu0 0.0
    %1298 = vmatprep.subr.mxu0 0.0
    %1299 = vmatpush1.msra.mxu0 0.0
    %1300 = vmatprep.subr.mxu0 0.0
    %1301 = vmatpush1.msra.mxu0 0.0
    %1302 = vmatprep.subr.mxu0 0.0
    %1303 = vmatpush1.msra.mxu0 0.0
    %1304 = vmatprep.subr.mxu0 0.0
    %1305 = vmatpush1.msra.mxu0 0.0
    %1306 = vmatprep.subr.mxu0 0.0
    %1307 = vmatpush1.msra.mxu0 0.0
    %1308 = vmatprep.subr.mxu0 0.0
    %1309 = vmatpush1.msra.mxu0 0.0
    %1310 = vmatprep.subr.mxu0 0.0
    %1311 = vmatpush1.msra.mxu0 0.0
    %1312 = vmatprep.subr.mxu0 0.0
    %1313 = vmatpush1.msra.mxu0 0.0
    %1314 = vmatprep.subr.mxu0 0.0
    %1315 = vmatpush1.msra.mxu0 %v1276
    %1316 = vmatprep.subr.mxu0 0.0
    %1317 = vmatpush1.msra.mxu0 %v1274
    %1318 = vmatprep.subr.mxu0 0.0
    %1319 = vmatpush1.msra.mxu0 %v1272
    %1320 = vmatprep.subr.mxu0 0.0
    %1321 = vmatpush1.msra.mxu0 %v1270
    %1322 = vmatprep.subr.mxu0 0.0
    %1323 = vmatpush2.msra.mxu0 0.0
    %1324 = vmatprep.subr.mxu0 0.0
    %1325 = vmatpush2.msra.mxu0 0.0
    %1326 = vmatprep.subr.mxu0 0.0
    %1327 = vmatpush2.msra.mxu0 0.0
    %1328 = vmatprep.subr.mxu0 0.0
    %1329 = vmatpush2.msra.mxu0 0.0
    %1330 = vmatprep.subr.mxu0 0.0
    %1331 = vmatpush2.msra.mxu0 0.0
    %1332 = vmatprep.subr.mxu0 0.0
    %1333 = vmatpush2.msra.mxu0 0.0
    %1334 = vmatprep.subr.mxu0 0.0
    %1335 = vmatpush2.msra.mxu0 0.0
    %1336 = vmatprep.subr.mxu0 0.0
    %1337 = vmatpush2.msra.mxu0 0.0
    %1338 = vmatprep.subr.mxu0 0.0
    %1339 = vmatpush2.msra.mxu0 0.0
    %1340 = vmatprep.subr.mxu0 0.0
    %1341 = vmatpush2.msra.mxu0 0.0
    %1342 = vmatprep.subr.mxu0 0.0
    %1343 = vmatpush2.msra.mxu0 0.0
    %1344 = vmatprep.subr.mxu0 0.0
    %1345 = vmatpush2.msra.mxu0 0.0
    %1346 = vmatprep.subr.mxu0 0.0
    %1347 = vmatpush2.msra.mxu0 0.0
    %1348 = vmatprep.subr.mxu0 0.0
    %1349 = vmatpush2.msra.mxu0 0.0
    %1350 = vmatprep.subr.mxu0 0.0
    %1351 = vmatpush2.msra.mxu0 0.0
    %1352 = vmatprep.subr.mxu0 0.0
    %1353 = vmatpush2.msra.mxu0 0.0
    %1354 = vmatprep.mubr.f32.mxu0 0.0
    %1355 = vmatmul.mubr.f32.gmra.mxu0 %v1282
    %v1356 = vpop.f32.mrf.mxu0
    %v1357 = vadd.f32 %v1264, %v1356
    %v1358 = vpop.f32.mrf.mxu0
    %1359 = vmatprep.mubr.f32.mxu0 0.0
    %1360 = vmatmul.mubr.f32.gmra.mxu0 %v1285
    %v1361 = vpop.f32.mrf.mxu0
    %v1362 = vadd.f32 %v1264, %v1361
    %v1363 = vpop.f32.mrf.mxu0
    %1364 = vmatprep.mubr.f32.mxu0 0.0
    %1365 = vmatmul.mubr.f32.gmra.mxu0 %v1288
    %v1366 = vpop.f32.mrf.mxu0
    %v1367 = vadd.f32 %v1264, %v1366
    %v1368 = vpop.f32.mrf.mxu0
    %1369 = vdwg.mxu0
    %v1370 = vlaneseq
    %v1371 = vshrl.u32 %v1370, 7
    %v1372 = vsub.s32 0, %v1371
    %v1373 = vrot.slane %v46, %v1372
    %v1374 = vmul.f32 %v1373, %v1357
    %v1375 = vmul.f32 %v1373, %v1362
    %v1376 = vmul.f32 %v1373, %v1367
    %v1377 = vadd.f32 %v38, %v1374
    %v1378 = vadd.f32 %v39, %v1375
    %v1379 = vadd.f32 %v40, %v1376
    %v1380 = vsel %vm50, %v1377, 0.0
    %1381 = vadd.xlane.f32.xlu0 %v1380
    %v1382 = vpop.xlane.xlu0 %1381
    %v1383 = vsel %vm50, %v1378, 0.0
    %1384 = vadd.xlane.f32.xlu0 %v1383
    %v1385 = vpop.xlane.xlu0 %1384
    %v1386 = vsel %vm57, %v1379, 0.0
    %1387 = vadd.xlane.f32.xlu0 %v1386
    %v1388 = vpop.xlane.xlu0 %1387
    %v1389 = vmul.f32 %v1382, %v61
    %v1390 = vmul.f32 %v1385, %v61
    %v1391 = vmul.f32 %v1388, %v61
    %v1392 = vsub.f32 %v1377, %v1389
    %v1393 = vsub.f32 %v1378, %v1390
    %v1394 = vsub.f32 %v1379, %v1391
    %v1395 = vmul.f32 %v1392, %v1392
    %v1396 = vmul.f32 %v1393, %v1393
    %v1397 = vmul.f32 %v1394, %v1394
    %v1398 = vsel %vm50, %v1395, 0.0
    %1399 = vadd.xlane.f32.xlu0 %v1398
    %v1400 = vpop.xlane.xlu0 %1399
    %v1401 = vsel %vm50, %v1396, 0.0
    %1402 = vadd.xlane.f32.xlu0 %v1401
    %v1403 = vpop.xlane.xlu0 %1402
    %v1404 = vsel %vm57, %v1397, 0.0
    %1405 = vadd.xlane.f32.xlu0 %v1404
    %v1406 = vpop.xlane.xlu0 %1405
    %v1407 = vmul.f32 %v1400, %v61
    %v1408 = vmul.f32 %v1403, %v61
    %v1409 = vmul.f32 %v1406, %v61
    %v1410 = vadd.f32 %v1407, 1e-05
    %v1411 = vadd.f32 %v1408, 1e-05
    %v1412 = vadd.f32 %v1409, 1e-05
    %v1413 = vrsqrt.pop %v1410
    %v1414 = vrsqrt.pop %v1411
    %v1415 = vrsqrt.pop %v1412
    %v1416 = vmul.f32 %v1392, %v1413
    %v1417 = vmul.f32 %v1393, %v1414
    %v1418 = vmul.f32 %v1394, %v1415
    %v1419 = vlaneseq
    %v1420 = vshrl.u32 %v1419, 7
    %v1421 = vsub.s32 0, %v1420
    %v1422 = vrot.slane %v43, %v1421
    %v1423 = vmul.f32 %v1416, %v1422
    %v1424 = vmul.f32 %v1417, %v1422
    %v1425 = vmul.f32 %v1418, %v1422
    %v1426 = vlaneseq
    %v1427 = vshrl.u32 %v1426, 7
    %v1428 = vsub.s32 0, %v1427
    %v1429 = vrot.slane %v44, %v1428
    %v1430 = vadd.f32 %v1423, %v1429
    %v1431 = vadd.f32 %v1424, %v1429
    %v1432 = vadd.f32 %v1425, %v1429
    %v1433 = vld [vmem:[%s1 + $0x8] sm:$0xff]
    %v1434 = vld [vmem:[%s1 + $0x10] sm:$0xff]
    %v1435 = vld [vmem:[%s1 + $0x20] sm:$0xff]
    %v1436 = vld [vmem:[%s1 + $0x28] sm:$0xff]
    %v1437 = vld [vmem:[%s1 + $0x38] sm:$0xff]
    %v1438 = vld [vmem:[%s1 + $0x40] sm:$0xff]
    %v1439 = vld [vmem:[%s1 + $0x50] sm:$0xff]
    %v1440 = vld [vmem:[%s1 + $0x58] sm:$0xff]
    %v1441 = vlaneseq
    %v1442 = vshrl.u32 %v1441, 7
    %v1443 = vsub.s32 0, %v1442
    %v1444 = vrot.slane %v49, %v1443
    %1453 = vrot.lane.b32.xlu0 %v1433, 64
    %v1454 = vpop.permute.xlu0 %1453
    %1455 = vrot.lane.b32.xlu0 %v1434, 64
    %v1456 = vpop.permute.xlu0 %1455
    %1457 = vrot.lane.b32.xlu0 %v1435, 64
    %v1458 = vpop.permute.xlu0 %1457
    %1459 = vrot.lane.b32.xlu0 %v1436, 64
    %v1460 = vpop.permute.xlu0 %1459
    %1461 = vrot.lane.b32.xlu0 %v1437, 64
    %v1462 = vpop.permute.xlu0 %1461
    %1463 = vrot.lane.b32.xlu0 %v1438, 64
    %v1464 = vpop.permute.xlu0 %1463
    %1465 = vrot.lane.b32.xlu0 %v1439, 64
    %v1466 = vpop.permute.xlu0 %1465
    %1467 = vrot.lane.b32.xlu0 %v1440, 64
    %v1468 = vpop.permute.xlu0 %1467
    %vm1469 = vcmask 523264
    %v1470 = vsel %vm1469, %v1454, %v1456
    %v1471 = vsel %vm1469, %v1458, %v1460
    %v1472 = vsel %vm1469, %v1462, %v1464
    %v1473 = vsel %vm1469, %v1466, %v1468
    %v1479 = vsel %vm50, %v1430, 0
    %v1482 = vsel %vm50, %v1431, 0
    %v1485 = vsel %vm50, %v1432, 0
    %1487 = vmatprep.subr.mxu0 0.0
    %1488 = vmatpush1.msra.mxu0 0.0
    %1489 = vmatprep.subr.mxu0 0.0
    %1490 = vmatpush1.msra.mxu0 0.0
    %1491 = vmatprep.subr.mxu0 0.0
    %1492 = vmatpush1.msra.mxu0 0.0
    %1493 = vmatprep.subr.mxu0 0.0
    %1494 = vmatpush1.msra.mxu0 0.0
    %1495 = vmatprep.subr.mxu0 0.0
    %1496 = vmatpush1.msra.mxu0 0.0
    %1497 = vmatprep.subr.mxu0 0.0
    %1498 = vmatpush1.msra.mxu0 0.0
    %1499 = vmatprep.subr.mxu0 0.0
    %1500 = vmatpush1.msra.mxu0 0.0
    %1501 = vmatprep.subr.mxu0 0.0
    %1502 = vmatpush1.msra.mxu0 0.0
    %1503 = vmatprep.subr.mxu0 0.0
    %1504 = vmatpush1.msra.mxu0 0.0
    %1505 = vmatprep.subr.mxu0 0.0
    %1506 = vmatpush1.msra.mxu0 0.0
    %1507 = vmatprep.subr.mxu0 0.0
    %1508 = vmatpush1.msra.mxu0 0.0
    %1509 = vmatprep.subr.mxu0 0.0
    %1510 = vmatpush1.msra.mxu0 0.0
    %1511 = vmatprep.subr.mxu0 0.0
    %1512 = vmatpush1.msra.mxu0 %v1473
    %1513 = vmatprep.subr.mxu0 0.0
    %1514 = vmatpush1.msra.mxu0 %v1472
    %1515 = vmatprep.subr.mxu0 0.0
    %1516 = vmatpush1.msra.mxu0 %v1471
    %1517 = vmatprep.subr.mxu0 0.0
    %1518 = vmatpush1.msra.mxu0 %v1470
    %1519 = vmatprep.subr.mxu0 0.0
    %1520 = vmatpush2.msra.mxu0 0.0
    %1521 = vmatprep.subr.mxu0 0.0
    %1522 = vmatpush2.msra.mxu0 0.0
    %1523 = vmatprep.subr.mxu0 0.0
    %1524 = vmatpush2.msra.mxu0 0.0
    %1525 = vmatprep.subr.mxu0 0.0
    %1526 = vmatpush2.msra.mxu0 0.0
    %1527 = vmatprep.subr.mxu0 0.0
    %1528 = vmatpush2.msra.mxu0 0.0
    %1529 = vmatprep.subr.mxu0 0.0
    %1530 = vmatpush2.msra.mxu0 0.0
    %1531 = vmatprep.subr.mxu0 0.0
    %1532 = vmatpush2.msra.mxu0 0.0
    %1533 = vmatprep.subr.mxu0 0.0
    %1534 = vmatpush2.msra.mxu0 0.0
    %1535 = vmatprep.subr.mxu0 0.0
    %1536 = vmatpush2.msra.mxu0 0.0
    %1537 = vmatprep.subr.mxu0 0.0
    %1538 = vmatpush2.msra.mxu0 0.0
    %1539 = vmatprep.subr.mxu0 0.0
    %1540 = vmatpush2.msra.mxu0 0.0
    %1541 = vmatprep.subr.mxu0 0.0
    %1542 = vmatpush2.msra.mxu0 0.0
    %1543 = vmatprep.subr.mxu0 0.0
    %1544 = vmatpush2.msra.mxu0 0.0
    %1545 = vmatprep.subr.mxu0 0.0
    %1546 = vmatpush2.msra.mxu0 0.0
    %1547 = vmatprep.subr.mxu0 0.0
    %1548 = vmatpush2.msra.mxu0 0.0
    %1549 = vmatprep.subr.mxu0 0.0
    %1550 = vmatpush2.msra.mxu0 0.0
    %1551 = vmatprep.mubr.f32.mxu0 0.0
    %1552 = vmatmul.mubr.f32.gmra.mxu0 %v1479
    %v1553 = vpop.f32.mrf.mxu0
    %v1554 = vadd.f32 %v1444, %v1553
    %v1555 = vpop.f32.mrf.mxu0
    %1556 = vmatprep.mubr.f32.mxu0 0.0
    %1557 = vmatmul.mubr.f32.gmra.mxu0 %v1482
    %v1558 = vpop.f32.mrf.mxu0
    %v1559 = vadd.f32 %v1444, %v1558
    %v1560 = vpop.f32.mrf.mxu0
    %1561 = vmatprep.mubr.f32.mxu0 0.0
    %1562 = vmatmul.mubr.f32.gmra.mxu0 %v1485
    %v1563 = vpop.f32.mrf.mxu0
    %v1564 = vadd.f32 %v1444, %v1563
    %v1565 = vpop.f32.mrf.mxu0
    %1566 = vdwg.mxu0
    %v1567 = vmul.f32 %v1554, 0.5
    %v1568 = vmul.f32 %v1559, 0.5
    %v1569 = vmul.f32 %v1564, 0.5
    %v1570 = vmul.f32 %v1554, 0.70710677
    %v1571 = vmul.f32 %v1559, 0.70710677
    %v1572 = vmul.f32 %v1564, 0.70710677
    %v1573 = verf.f32.pop %v1570
    %v1574 = verf.f32.pop %v1571
    %v1575 = verf.f32.pop %v1572
    %v1576 = vadd.f32 %v1573, 1.0
    %v1577 = vadd.f32 %v1574, 1.0
    %v1578 = vadd.f32 %v1575, 1.0
    %v1579 = vmul.f32 %v1567, %v1576
    %v1580 = vmul.f32 %v1568, %v1577
    %v1581 = vmul.f32 %v1569, %v1578
    %v1582 = vld [vmem:[%s2] sm:$0xff]
    %v1583 = vld [vmem:[%s2 + $0x8] sm:$0xff]
    %v1584 = vld [vmem:[%s2 + $0x10] sm:$0xff]
    %v1585 = vld [vmem:[%s2 + $0x18] sm:$0xff]
    %v1586 = vld [vmem:[%s2 + $0x20] sm:$0xff]
    %v1587 = vld [vmem:[%s2 + $0x28] sm:$0xff]
    %v1588 = vld [vmem:[%s2 + $0x30] sm:$0xff]
    %v1589 = vld [vmem:[%s2 + $0x38] sm:$0xff]
    %v1590 = vld [vmem:[%s2 + $0x40] sm:$0xff]
    %v1591 = vld [vmem:[%s2 + $0x48] sm:$0xff]
    %v1592 = vld [vmem:[%s2 + $0x50] sm:$0xff]
    %v1593 = vld [vmem:[%s2 + $0x58] sm:$0xff]
    %v1594 = vld [vmem:[%s2 + $0x60] sm:$0xff]
    %v1595 = vld [vmem:[%s2 + $0x68] sm:$0xff]
    %v1596 = vld [vmem:[%s2 + $0x70] sm:$0xff]
    %v1597 = vld [vmem:[%s2 + $0x78] sm:$0xff]
    %v1598 = vlaneseq
    %v1599 = vshrl.u32 %v1598, 7
    %v1600 = vsub.s32 0, %v1599
    %v1601 = vrot.slane %v48, %v1600
    %1602 = vmatprep.subr.mxu0 0.0
    %1603 = vmatpush1.msra.mxu0 %v1597
    %1604 = vmatprep.subr.mxu0 0.0
    %1605 = vmatpush1.msra.mxu0 %v1596
    %1606 = vmatprep.subr.mxu0 0.0
    %1607 = vmatpush1.msra.mxu0 %v1595
    %1608 = vmatprep.subr.mxu0 0.0
    %1609 = vmatpush1.msra.mxu0 %v1594
    %1610 = vmatprep.subr.mxu0 0.0
    %1611 = vmatpush1.msra.mxu0 %v1593
    %1612 = vmatprep.subr.mxu0 0.0
    %1613 = vmatpush1.msra.mxu0 %v1592
    %1614 = vmatprep.subr.mxu0 0.0
    %1615 = vmatpush1.msra.mxu0 %v1591
    %1616 = vmatprep.subr.mxu0 0.0
    %1617 = vmatpush1.msra.mxu0 %v1590
    %1618 = vmatprep.subr.mxu0 0.0
    %1619 = vmatpush1.msra.mxu0 %v1589
    %1620 = vmatprep.subr.mxu0 0.0
    %1621 = vmatpush1.msra.mxu0 %v1588
    %1622 = vmatprep.subr.mxu0 0.0
    %1623 = vmatpush1.msra.mxu0 %v1587
    %1624 = vmatprep.subr.mxu0 0.0
    %1625 = vmatpush1.msra.mxu0 %v1586
    %1626 = vmatprep.subr.mxu0 0.0
    %1627 = vmatpush1.msra.mxu0 %v1585
    %1628 = vmatprep.subr.mxu0 0.0
    %1629 = vmatpush1.msra.mxu0 %v1584
    %1630 = vmatprep.subr.mxu0 0.0
    %1631 = vmatpush1.msra.mxu0 %v1583
    %1632 = vmatprep.subr.mxu0 0.0
    %1633 = vmatpush1.msra.mxu0 %v1582
    %1634 = vmatprep.subr.mxu0 0.0
    %1635 = vmatpush2.msra.mxu0 0.0
    %1636 = vmatprep.subr.mxu0 0.0
    %1637 = vmatpush2.msra.mxu0 0.0
    %1638 = vmatprep.subr.mxu0 0.0
    %1639 = vmatpush2.msra.mxu0 0.0
    %1640 = vmatprep.subr.mxu0 0.0
    %1641 = vmatpush2.msra.mxu0 0.0
    %1642 = vmatprep.subr.mxu0 0.0
    %1643 = vmatpush2.msra.mxu0 0.0
    %1644 = vmatprep.subr.mxu0 0.0
    %1645 = vmatpush2.msra.mxu0 0.0
    %1646 = vmatprep.subr.mxu0 0.0
    %1647 = vmatpush2.msra.mxu0 0.0
    %1648 = vmatprep.subr.mxu0 0.0
    %1649 = vmatpush2.msra.mxu0 0.0
    %1650 = vmatprep.subr.mxu0 0.0
    %1651 = vmatpush2.msra.mxu0 0.0
    %1652 = vmatprep.subr.mxu0 0.0
    %1653 = vmatpush2.msra.mxu0 0.0
    %1654 = vmatprep.subr.mxu0 0.0
    %1655 = vmatpush2.msra.mxu0 0.0
    %1656 = vmatprep.subr.mxu0 0.0
    %1657 = vmatpush2.msra.mxu0 0.0
    %1658 = vmatprep.subr.mxu0 0.0
    %1659 = vmatpush2.msra.mxu0 0.0
    %1660 = vmatprep.subr.mxu0 0.0
    %1661 = vmatpush2.msra.mxu0 0.0
    %1662 = vmatprep.subr.mxu0 0.0
    %1663 = vmatpush2.msra.mxu0 0.0
    %1664 = vmatprep.subr.mxu0 0.0
    %1665 = vmatpush2.msra.mxu0 0.0
    %1666 = vmatprep.mubr.f32.mxu0 0.0
    %1667 = vmatmul.mubr.f32.gmra.mxu0 %v1579
    %v1668 = vpop.f32.mrf.mxu0
    %v1669 = vadd.f32 %v1601, %v1668
    %v1670 = vpop.f32.mrf.mxu0
    %1671 = vmatprep.mubr.f32.mxu0 0.0
    %1672 = vmatmul.mubr.f32.gmra.mxu0 %v1580
    %v1673 = vpop.f32.mrf.mxu0
    %v1674 = vadd.f32 %v1601, %v1673
    %v1675 = vpop.f32.mrf.mxu0
    %1676 = vmatprep.mubr.f32.mxu0 0.0
    %1677 = vmatmul.mubr.f32.gmra.mxu0 %v1581
    %v1678 = vpop.f32.mrf.mxu0
    %v1679 = vadd.f32 %v1601, %v1678
    %v1680 = vpop.f32.mrf.mxu0
    %1681 = vdwg.mxu0
    %v1682 = vlaneseq
    %v1683 = vshrl.u32 %v1682, 7
    %v1684 = vsub.s32 0, %v1683
    %v1685 = vrot.slane %v47, %v1684
    %v1686 = vmul.f32 %v1685, %v1669
    %v1687 = vmul.f32 %v1685, %v1674
    %v1688 = vmul.f32 %v1685, %v1679
    %v1689 = vadd.f32 %v1377, %v1686
    %v1690 = vadd.f32 %v1378, %v1687
    %v1691 = vadd.f32 %v1379, %v1688
    %1692 = vst.msk [vmem:[#allocation5] sm:$0xff] %vm50, %v1689
    %1693 = vst.msk [vmem:[#allocation5 + $0x8] sm:$0xff] %vm50, %v1690
    %1694 = vst.msk [vmem:[#allocation5 + $0x10] sm:$0x3] %vm57, %v1691
    // Predicated region
    $region30: #{tpu_custom_call.1} parent=1 // pred_check
      _
    $region31: #{tpu_custom_call.1} parent=1 // pred_check_branch
      %1696 = sbr.rel (0) target = $region33
    $region32: #{tpu_custom_call.1} parent=1 // pred_region
      %s1698 = ssub.s32 384, 384
      %1699 = vsyncadd [#allocation4], %s1698
      %s1700 = sshll.u32 [#allocation5], 4
      %s1701 = int_to_ptr.vmem [resolvable:$true] %s1700
      %1706 = dma.vmem_to_hbm [thread:$0]  %s1701, 384, %s6, [#allocation4], 128, 128, 8
    $region33: #{tpu_custom_call.1} parent=1 // pred_fallthru
      _
    // Predicated region
    $region34: #{tpu_custom_call.1} parent=1 // pred_check
      _
    $region35: #{tpu_custom_call.1} parent=1 // pred_check_branch
      %1708 = sbr.rel (0) target = $region37
    $region36: #{tpu_custom_call.1} parent=1 // pred_region
      %1709 = dma.done [#allocation4], 384
    $region37: #{tpu_custom_call.1} parent=1 // pred_fallthru
      _
    %1710 = vsyncpa [#allocation3], 1
    %1711 = vsyncpa [#allocation4], 1

</llo_original>
